<compile_context>
chip_gen: v5e
topology: v5e:2x2
jax: 0.10.0
libtpu: 0.0.40
codegen_flags: <defaults>
</compile_context>

<pallas_src>
import math
from functools import partial

import jax
import jax.numpy as jnp
from jax.experimental import pallas as pl
from jax.experimental.pallas import tpu as pltpu


def _mambaformer_kernel(x_ref,
                        wq_ref, bq_ref, wk_ref, bk_ref, wv_ref, bv_ref,
                        wo_ref, bo_ref,
                        w_in_ref, convw_ref, convb_ref,
                        w_dr_ref, w_B_ref, w_C_ref, w_dt_ref, b_dt_ref,
                        A_ref, Dp_ref, w_outp_ref,
                        out_ref,
                        u_scr, d_scr, b_scr, c_scr, y_scr, state_scr,
                        *, L, D, H, Hd, Di, N, R, K, T, scale):
    f32 = jnp.float32
    neg_min = jnp.finfo(f32).min

    x0 = x_ref[...]                                   # (L, D) f32

    # ---------------- Multi-Query Attention (causal), fused heads ----------------
    # scale folded into q once (L*D mults instead of H*L*L).
    q = (jnp.dot(x0, wq_ref[...], preferred_element_type=f32) + bq_ref[...]) * scale
    k = jnp.dot(x0, wk_ref[...], preferred_element_type=f32) + bk_ref[...]   # (L, Hd)
    v = jnp.dot(x0, wv_ref[...], preferred_element_type=f32) + bv_ref[...]   # (L, Hd)

    # head-major row packing: row h*L + l holds the query of (head h, position l);
    # one score matmul / softmax / PV matmul for all heads.
    q_r = jnp.concatenate([q[:, h * Hd:(h + 1) * Hd] for h in range(H)], axis=0)  # (H*L, Hd)
    s_all = jax.lax.dot_general(q_r, k,
                                (((1,), (1,)), ((), ())),
                                preferred_element_type=f32)                        # (H*L, L)

    row = jax.lax.broadcasted_iota(jnp.int32, (L, L), 0)
    col = jax.lax.broadcasted_iota(jnp.int32, (L, L), 1)
    row_all = jnp.concatenate([row] * H, axis=0)                                   # (H*L, L)
    col_all = jnp.concatenate([col] * H, axis=0)
    s_all = jnp.where(col_all <= row_all, s_all, neg_min)                          # masked_fill(finfo.min)
    p = jax.nn.softmax(s_all, axis=-1)

    ctx_r = jnp.dot(p, v, preferred_element_type=f32)                              # (H*L, Hd)
    # unpack heads back onto the lane axis: (L, D) with head h in cols [h*Hd, (h+1)*Hd)
    ctx = jnp.concatenate([ctx_r[h * L:(h + 1) * L, :] for h in range(H)], axis=1)  # (L, D)
    # ONE K=D out-projection
    attn_out = jnp.dot(ctx, wo_ref[...], preferred_element_type=f32) + bo_ref[...]

    x1 = attn_out + x0                                                             # residual #1

    # ---------------- Mamba block ----------------
    xr = jnp.dot(x1, w_in_ref[...], preferred_element_type=f32)                    # (L, 2*Di)
    xc = xr[:, :Di]          # lane-aligned split (Di is a multiple of the lane width in prod)
    res = xr[:, Di:]

    # depthwise causal conv1d: 0-aligned shifted accumulation (no (L+K-1) pad buffer,
    # no unaligned tap slices).  tap shift t uses weight row K-1-t.
    acc = convw_ref[K - 1:K, :] * xc                                               # t = 0
    for t in range(1, K):
        shifted = jnp.concatenate([jnp.zeros((t, Di), f32), xc[:L - t, :]], axis=0)
        acc = acc + convw_ref[K - 1 - t:K - t, :] * shifted
    conv = acc + convb_ref[...]
    xconv = conv * jax.nn.sigmoid(conv)                                            # SiLU

    # projections for the selective scan (split weights -> lane-aligned outputs)
    delta_r = jnp.dot(xconv, w_dr_ref[...], preferred_element_type=f32)            # (L, R)
    Bm = jnp.dot(xconv, w_B_ref[...], preferred_element_type=f32)                  # (L, N)
    Cm = jnp.dot(xconv, w_C_ref[...], preferred_element_type=f32)                  # (L, N)
    delta = jax.nn.softplus(
        jnp.dot(delta_r, w_dt_ref[...], preferred_element_type=f32) + b_dt_ref[...])  # (L, Di)

    A = A_ref[...]                                  # (N, Di), already -exp(A_log) (hoisted)

    # stage scan operands in VMEM, then run the chunked recurrence
    u_scr[...] = xconv
    d_scr[...] = delta
    b_scr[...] = Bm
    c_scr[...] = Cm
    state_scr[...] = jnp.zeros((N, Di), f32)

    @pl.loop(0, L // T)
    def _scan_chunk(cidx):
        off = pl.multiple_of(cidx * T, T)           # sublane-aligned chunk offset
        d_c = d_scr[pl.ds(off, T), :]               # (T, Di)
        u_c = u_scr[pl.ds(off, T), :]               # (T, Di)
        du_c = d_c * u_c                            # off the serial chain
        bT = b_scr[pl.ds(off, T), :].T              # (N, T)
        cT = c_scr[pl.ds(off, T), :].T              # (N, T)
        s = state_scr[...]                          # (N, Di)
        ys = []
        # static unroll: the exp / outer-product work for every step is visible to
        # the scheduler and pipelines off the serial s = dA*s + dBu chain.
        for i in range(T):
            dA_i = jnp.exp(d_c[i:i + 1, :] * A)                 # (N, Di)
            dBu_i = du_c[i:i + 1, :] * bT[:, i:i + 1]           # (N, Di)
            s = dA_i * s + dBu_i
            ys.append(jnp.sum(s * cT[:, i:i + 1], axis=0, keepdims=True))   # (1, Di)
        state_scr[...] = s
        # dense, sublane-aligned (T, Di) tile store (no per-row masked stores)
        y_scr[pl.ds(off, T), :] = jnp.concatenate(ys, axis=0)

    y = y_scr[...] + xconv * Dp_ref[...]            # + u * D
    y = y * (res * jax.nn.sigmoid(res))             # gate with SiLU(res)
    mo = jnp.dot(y, w_outp_ref[...], preferred_element_type=f32)                   # (L, D)

    out_ref[...] = mo + x1                          # residual #2


def mambaformer_block(x, params, *, heads, d_state, d_conv, chunk=None):
    B, L, D = x.shape
    H = heads
    Hd = D // H
    expand = d_conv                        # zeta positional binding (see NOTE above)
    K = 4                                  # zeta MambaBlock default conv kernel size
    Di = D * expand
    N = d_state
    R = math.ceil(D / 16)
    scale = 1.0 / math.sqrt(Hd)

    # scan chunk length: largest sublane-aligned divisor of L (8..32)
    if chunk is None:
        T = 1
        for cand in (32, 16, 8, 4, 2):
            if L % cand == 0:
                T = cand
                break
    else:
        T = chunk
    assert L % T == 0

    (wq, bq, wk, bk, wv, bv, wo, bo, w_in, convw, convb,
     w_dr, w_B, w_C, w_dt, b_dt, A_logT, Dp, w_outp) = params

    A = -jnp.exp(A_logT)                   # hoisted constant transform
    kparams = (wq, bq, wk, bk, wv, bv, wo, bo, w_in, convw, convb,
               w_dr, w_B, w_C, w_dt, b_dt, A, Dp, w_outp)

    kernel = partial(_mambaformer_kernel, L=L, D=D, H=H, Hd=Hd, Di=Di,
                     N=N, R=R, K=K, T=T, scale=scale)

    def full2d(a):
        return pl.BlockSpec(a.shape, lambda b: (0, 0))   # all params are 2-D, resident

    scratch = [
        pltpu.VMEM((L, Di), jnp.float32),    # u (xconv)
        pltpu.VMEM((L, Di), jnp.float32),    # delta
        pltpu.VMEM((L, N), jnp.float32),     # B
        pltpu.VMEM((L, N), jnp.float32),     # C
        pltpu.VMEM((L, Di), jnp.float32),    # scan output y
        pltpu.VMEM((N, Di), jnp.float32),    # carried SSM state
    ]

    # explicit scoped-VMEM budget sized from the working set
    param_bytes = sum(int(a.size) * a.dtype.itemsize for a in kparams)
    scratch_bytes = (3 * L * Di + 2 * L * N + N * Di) * 4
    act_bytes = 4 * (L * 2 * Di + H * L * L + 4 * L * Di + 2 * L * D)
    io_bytes = 2 * 2 * L * D * 4
    est = 2 * param_bytes + scratch_bytes + act_bytes + io_bytes + (8 << 20)
    vmem_limit = int(min(64 << 20, max(32 << 20, est)))

    grid_spec = pltpu.PrefetchScalarGridSpec(
        num_scalar_prefetch=0,
        grid=(B,),
        in_specs=[pl.BlockSpec((pl.Squeezed(), L, D), lambda b: (b, 0, 0))]
                 + [full2d(a) for a in kparams],
        out_specs=pl.BlockSpec((pl.Squeezed(), L, D), lambda b: (b, 0, 0)),
        scratch_shapes=scratch,
    )

    return pl.pallas_call(
        kernel,
        out_shape=jax.ShapeDtypeStruct((B, L, D), jnp.float32),
        grid_spec=grid_spec,
        compiler_params=pltpu.CompilerParams(
            dimension_semantics=("parallel",),
            vmem_limit_bytes=vmem_limit),
    )(x, *kparams)


def init_params(key, *, dim, d_state, d_conv, heads):
    D = dim
    Hd = D // heads
    expand = d_conv
    K = 4
    Di = D * expand
    N = d_state
    R = math.ceil(D / 16)

    ks = jax.random.split(key, 17)
    g = lambda k, shp, s=0.02: (s * jax.random.normal(k, shp)).astype(jnp.float32)

    wq = g(ks[0], (D, D));    bq = g(ks[1], (1, D))
    wk = g(ks[2], (D, Hd));   bk = g(ks[3], (1, Hd))
    wv = g(ks[4], (D, Hd));   bv = g(ks[5], (1, Hd))
    wo = g(ks[6], (D, D));    bo = g(ks[7], (1, D))
    w_in = g(ks[8], (D, 2 * Di))                    # in_proj^T (no bias)
    convw = g(ks[9], (K, Di), 0.1)                  # depthwise conv weight (tap, channel)
    convb = g(ks[10], (1, Di), 0.1)
    w_dr = g(ks[11], (Di, R))                       # x_proj^T split: delta rank
    w_B = g(ks[12], (Di, N))                        # x_proj^T split: B
    w_C = g(ks[13], (Di, N))                        # x_proj^T split: C
    w_dt = g(ks[14], (R, Di), 0.1)                  # dt_proj^T
    b_dt = g(ks[15], (1, Di), 0.1)
    # A_log stored transposed (N, Di): A_logT[n, d] = log(n+1)
    A_logT = (jnp.log(jnp.arange(1, N + 1, dtype=jnp.float32))[:, None]
              * jnp.ones((1, Di), jnp.float32))
    Dp = jnp.ones((1, Di), jnp.float32)
    w_outp = g(ks[16], (Di, D))                     # mamba out_proj^T (no bias)
    return (wq, bq, wk, bk, wv, bv, wo, bo, w_in, convw, convb,
            w_dr, w_B, w_C, w_dt, b_dt, A_logT, Dp, w_outp)


def reference(x, params, *, heads, d_state, d_conv):
    B, L, D = x.shape
    H = heads
    Hd = D // H
    expand = d_conv
    K = 4
    Di = D * expand
    N = d_state
    R = math.ceil(D / 16)
    scale = 1.0 / math.sqrt(Hd)
    (wq, bq, wk, bk, wv, bv, wo, bo, w_in, convw, convb,
     w_dr, w_B, w_C, w_dt, b_dt, A_logT, Dp, w_outp) = params

    with jax.default_matmul_precision("highest"):
        q = (x @ wq + bq) * scale
        k = x @ wk + bk
        v = x @ wv + bv
        qh = q.reshape(B, L, H, Hd).transpose(0, 2, 1, 3)
        s = jnp.einsum("bhld,bsd->bhls", qh, k)
        mask = jnp.tril(jnp.ones((L, L), bool))
        s = jnp.where(mask[None, None], s, jnp.finfo(jnp.float32).min)
        p = jax.nn.softmax(s, axis=-1)
        ctx = jnp.einsum("bhls,bsd->bhld", p, v).transpose(0, 2, 1, 3).reshape(B, L, D)
        x1 = (ctx @ wo + bo) + x

        xr = x1 @ w_in
        xc, res = xr[..., :Di], xr[..., Di:]
        xcp = jnp.concatenate([jnp.zeros((B, K - 1, Di), jnp.float32), xc], axis=1)
        conv = sum(convw[j] * xcp[:, j:j + L, :] for j in range(K)) + convb
        xconv = jax.nn.silu(conv)

        A = -jnp.exp(A_logT)                         # (N, Di)
        dr = xconv @ w_dr
        Bm = xconv @ w_B
        Cm = xconv @ w_C
        delta = jax.nn.softplus(dr @ w_dt + b_dt)    # (B, L, Di)

        st = jnp.zeros((B, N, Di), jnp.float32)
        ys = []
        for i in range(L):
            dA = jnp.exp(delta[:, i, None, :] * A[None])
            dBu = (delta[:, i, None, :] * xconv[:, i, None, :]) * Bm[:, i, :, None]
            st = dA * st + dBu
            ys.append(jnp.sum(st * Cm[:, i, :, None], axis=1))
        y = jnp.stack(ys, axis=1)
        y = y + xconv * Dp
        y = y * jax.nn.silu(res)
        return (y @ w_outp) + x1


if __name__ == "__main__":
    B, L = 2, 8
    dim, d_state, d_conv, heads, dim_head = 32, 16, 4, 4, 8   # dim_head unused by MQA

    key = jax.random.PRNGKey(0)
    kx, kp = jax.random.split(key)
    x = jax.random.normal(kx, (B, L, dim), dtype=jnp.float32)
    params = init_params(kp, dim=dim, d_state=d_state, d_conv=d_conv, heads=heads)

    out = mambaformer_block(x, params, heads=heads, d_state=d_state, d_conv=d_conv)
    out = jax.block_until_ready(out)

    ref = reference(x, params, heads=heads, d_state=d_state, d_conv=d_conv)
    assert out.shape == (B, L, dim)
    max_diff = float(jnp.max(jnp.abs(out - ref)))
    assert jnp.allclose(out, ref, atol=1e-2, rtol=1e-2), f"max_diff={max_diff}"
    print("KERNEL_OK")
</pallas_src>

<mosaic_0001>
module attributes {stable_mosaic.version = 11 : i64} {
  func.func @_mambaformer_kernel(%arg0: i32, %arg1: memref<1x8x32xf32, #tpu.memory_space<vmem>>, %arg2: memref<32x32xf32, #tpu.memory_space<vmem>>, %arg3: memref<1x32xf32, #tpu.memory_space<vmem>>, %arg4: memref<32x8xf32, #tpu.memory_space<vmem>>, %arg5: memref<1x8xf32, #tpu.memory_space<vmem>>, %arg6: memref<32x8xf32, #tpu.memory_space<vmem>>, %arg7: memref<1x8xf32, #tpu.memory_space<vmem>>, %arg8: memref<32x32xf32, #tpu.memory_space<vmem>>, %arg9: memref<1x32xf32, #tpu.memory_space<vmem>>, %arg10: memref<32x256xf32, #tpu.memory_space<vmem>>, %arg11: memref<4x128xf32, #tpu.memory_space<vmem>>, %arg12: memref<1x128xf32, #tpu.memory_space<vmem>>, %arg13: memref<128x2xf32, #tpu.memory_space<vmem>>, %arg14: memref<128x16xf32, #tpu.memory_space<vmem>>, %arg15: memref<128x16xf32, #tpu.memory_space<vmem>>, %arg16: memref<2x128xf32, #tpu.memory_space<vmem>>, %arg17: memref<1x128xf32, #tpu.memory_space<vmem>>, %arg18: memref<16x128xf32, #tpu.memory_space<vmem>>, %arg19: memref<1x128xf32, #tpu.memory_space<vmem>>, %arg20: memref<128x32xf32, #tpu.memory_space<vmem>>, %arg21: memref<1x8x32xf32, #tpu.memory_space<vmem>>, %arg22: memref<8x128xf32, #tpu.memory_space<vmem>>, %arg23: memref<8x128xf32, #tpu.memory_space<vmem>>, %arg24: memref<8x16xf32, #tpu.memory_space<vmem>>, %arg25: memref<8x16xf32, #tpu.memory_space<vmem>>, %arg26: memref<8x128xf32, #tpu.memory_space<vmem>>, %arg27: memref<16x128xf32, #tpu.memory_space<vmem>>) attributes {dimension_semantics = [#tpu.dimension_semantics<parallel>], iteration_bounds = array<i64: 2>, scalar_prefetch = 0 : i64, scratch_operands = 6 : i64, tpu.core_type = #tpu.core_type<tc>, window_params = [{transform_indices = @transform_0, window_bounds = array<i64: 1, 8, 32>}, {pipeline_mode = #tpu.pipeline_mode<synchronous>, transform_indices = @transform_1, window_bounds = array<i64: 32, 32>}, {pipeline_mode = #tpu.pipeline_mode<synchronous>, transform_indices = @transform_2, window_bounds = array<i64: 1, 32>}, {pipeline_mode = #tpu.pipeline_mode<synchronous>, transform_indices = @transform_3, window_bounds = array<i64: 32, 8>}, {pipeline_mode = #tpu.pipeline_mode<synchronous>, transform_indices = @transform_4, window_bounds = array<i64: 1, 8>}, {pipeline_mode = #tpu.pipeline_mode<synchronous>, transform_indices = @transform_5, window_bounds = array<i64: 32, 8>}, {pipeline_mode = #tpu.pipeline_mode<synchronous>, transform_indices = @transform_6, window_bounds = array<i64: 1, 8>}, {pipeline_mode = #tpu.pipeline_mode<synchronous>, transform_indices = @transform_7, window_bounds = array<i64: 32, 32>}, {pipeline_mode = #tpu.pipeline_mode<synchronous>, transform_indices = @transform_8, window_bounds = array<i64: 1, 32>}, {pipeline_mode = #tpu.pipeline_mode<synchronous>, transform_indices = @transform_9, window_bounds = array<i64: 32, 256>}, {pipeline_mode = #tpu.pipeline_mode<synchronous>, transform_indices = @transform_10, window_bounds = array<i64: 4, 128>}, {pipeline_mode = #tpu.pipeline_mode<synchronous>, transform_indices = @transform_11, window_bounds = array<i64: 1, 128>}, {pipeline_mode = #tpu.pipeline_mode<synchronous>, transform_indices = @transform_12, window_bounds = array<i64: 128, 2>}, {pipeline_mode = #tpu.pipeline_mode<synchronous>, transform_indices = @transform_13, window_bounds = array<i64: 128, 16>}, {pipeline_mode = #tpu.pipeline_mode<synchronous>, transform_indices = @transform_14, window_bounds = array<i64: 128, 16>}, {pipeline_mode = #tpu.pipeline_mode<synchronous>, transform_indices = @transform_15, window_bounds = array<i64: 2, 128>}, {pipeline_mode = #tpu.pipeline_mode<synchronous>, transform_indices = @transform_16, window_bounds = array<i64: 1, 128>}, {pipeline_mode = #tpu.pipeline_mode<synchronous>, transform_indices = @transform_17, window_bounds = array<i64: 16, 128>}, {pipeline_mode = #tpu.pipeline_mode<synchronous>, transform_indices = @transform_18, window_bounds = array<i64: 1, 128>}, {pipeline_mode = #tpu.pipeline_mode<synchronous>, transform_indices = @transform_19, window_bounds = array<i64: 128, 32>}, {transform_indices = @transform_20, window_bounds = array<i64: 1, 8, 32>}]} {
    %c0 = arith.constant 0 : index
    %c0_0 = arith.constant 0 : index
    %c0_1 = arith.constant 0 : index
    %0 = vector.load %arg1[%c0, %c0_0, %c0_1] : memref<1x8x32xf32, #tpu.memory_space<vmem>>, vector<1x8x32xf32>
    %1 = vector.shape_cast %0 : vector<1x8x32xf32> to vector<8x32xf32>
    %c0_2 = arith.constant 0 : index
    %c0_3 = arith.constant 0 : index
    %2 = vector.load %arg2[%c0_2, %c0_3] : memref<32x32xf32, #tpu.memory_space<vmem>>, vector<32x32xf32>
    %cst = arith.constant dense<0.000000e+00> : vector<8x32xf32>
    %3 = tpu.matmul %1, %2, %cst {dimension_numbers = #tpu.dot_dimension_numbers<[1], [0], [0], [1], [0, 0, 1, 1], [], []>} : vector<8x32xf32>, vector<32x32xf32>, vector<8x32xf32> -> vector<8x32xf32>
    %c0_4 = arith.constant 0 : index
    %c0_5 = arith.constant 0 : index
    %4 = vector.load %arg3[%c0_4, %c0_5] : memref<1x32xf32, #tpu.memory_space<vmem>>, vector<1x32xf32>
    %5 = vector.broadcast %4 : vector<1x32xf32> to vector<8x32xf32>
    %6 = arith.addf %3, %5 : vector<8x32xf32>
    %cst_6 = arith.constant 0.353553385 : f32
    %7 = vector.broadcast %cst_6 : f32 to vector<8x32xf32>
    %8 = arith.mulf %6, %7 : vector<8x32xf32>
    %c0_7 = arith.constant 0 : index
    %c0_8 = arith.constant 0 : index
    %9 = vector.load %arg4[%c0_7, %c0_8] : memref<32x8xf32, #tpu.memory_space<vmem>>, vector<32x8xf32>
    %cst_9 = arith.constant dense<0.000000e+00> : vector<8x8xf32>
    %10 = tpu.matmul %1, %9, %cst_9 {dimension_numbers = #tpu.dot_dimension_numbers<[1], [0], [0], [1], [0, 0, 1, 1], [], []>} : vector<8x32xf32>, vector<32x8xf32>, vector<8x8xf32> -> vector<8x8xf32>
    %c0_10 = arith.constant 0 : index
    %c0_11 = arith.constant 0 : index
    %11 = vector.load %arg5[%c0_10, %c0_11] : memref<1x8xf32, #tpu.memory_space<vmem>>, vector<1x8xf32>
    %12 = vector.broadcast %11 : vector<1x8xf32> to vector<8x8xf32>
    %13 = arith.addf %10, %12 : vector<8x8xf32>
    %c0_12 = arith.constant 0 : index
    %c0_13 = arith.constant 0 : index
    %14 = vector.load %arg6[%c0_12, %c0_13] : memref<32x8xf32, #tpu.memory_space<vmem>>, vector<32x8xf32>
    %cst_14 = arith.constant dense<0.000000e+00> : vector<8x8xf32>
    %15 = tpu.matmul %1, %14, %cst_14 {dimension_numbers = #tpu.dot_dimension_numbers<[1], [0], [0], [1], [0, 0, 1, 1], [], []>} : vector<8x32xf32>, vector<32x8xf32>, vector<8x8xf32> -> vector<8x8xf32>
    %c0_15 = arith.constant 0 : index
    %c0_16 = arith.constant 0 : index
    %16 = vector.load %arg7[%c0_15, %c0_16] : memref<1x8xf32, #tpu.memory_space<vmem>>, vector<1x8xf32>
    %17 = vector.broadcast %16 : vector<1x8xf32> to vector<8x8xf32>
    %18 = arith.addf %15, %17 : vector<8x8xf32>
    %19 = vector.extract_strided_slice %8 {offsets = [0, 0], sizes = [8, 8], strides = [1, 1]} : vector<8x32xf32> to vector<8x8xf32>
    %20 = vector.extract_strided_slice %8 {offsets = [0, 8], sizes = [8, 8], strides = [1, 1]} : vector<8x32xf32> to vector<8x8xf32>
    %21 = vector.extract_strided_slice %8 {offsets = [0, 16], sizes = [8, 8], strides = [1, 1]} : vector<8x32xf32> to vector<8x8xf32>
    %22 = vector.extract_strided_slice %8 {offsets = [0, 24], sizes = [8, 8], strides = [1, 1]} : vector<8x32xf32> to vector<8x8xf32>
    %23 = tpu.concatenate %19, %20, %21, %22 in 0 : vector<8x8xf32>, vector<8x8xf32>, vector<8x8xf32>, vector<8x8xf32> -> vector<32x8xf32>
    %cst_17 = arith.constant dense<0.000000e+00> : vector<32x8xf32>
    %24 = tpu.matmul %23, %13, %cst_17 {dimension_numbers = #tpu.dot_dimension_numbers<[1], [1], [0], [0], [0, 0, 1, 0], [], []>} : vector<32x8xf32>, vector<8x8xf32>, vector<32x8xf32> -> vector<32x8xf32>
    %25 = tpu.iota {dimensions = array<i32: 0>} : vector<8x8xi32>
    %26 = tpu.iota {dimensions = array<i32: 1>} : vector<8x8xi32>
    %27 = tpu.concatenate %25, %25, %25, %25 in 0 : vector<8x8xi32>, vector<8x8xi32>, vector<8x8xi32>, vector<8x8xi32> -> vector<32x8xi32>
    %28 = tpu.concatenate %26, %26, %26, %26 in 0 : vector<8x8xi32>, vector<8x8xi32>, vector<8x8xi32>, vector<8x8xi32> -> vector<32x8xi32>
    %29 = arith.cmpi sle, %28, %27 : vector<32x8xi32>
    %cst_18 = arith.constant -3.40282347E+38 : f32
    %30 = vector.broadcast %cst_18 : f32 to vector<32x8xf32>
    %31 = arith.select %29, %24, %30 : vector<32x8xi1>, vector<32x8xf32>
    %cst_19 = arith.constant dense<0xFF800000> : vector<32xf32>
    %32 = vector.multi_reduction <maximumf>, %31, %cst_19 [1] : vector<32x8xf32> to vector<32xf32>
    %cst_20 = arith.constant 0xFF800000 : f32
    %33 = vector.broadcast %cst_20 : f32 to vector<32xf32>
    %34 = arith.maximumf %33, %32 : vector<32xf32>
    %35 = vector.shape_cast %34 : vector<32xf32> to vector<32x1xf32>
    %36 = vector.broadcast %35 : vector<32x1xf32> to vector<32x8xf32>
    %37 = arith.subf %31, %36 : vector<32x8xf32>
    %38 = math.exp %37 : vector<32x8xf32>
    %cst_21 = arith.constant dense<0.000000e+00> : vector<32xf32>
    %39 = vector.multi_reduction <add>, %38, %cst_21 [1] : vector<32x8xf32> to vector<32xf32>
    %40 = vector.shape_cast %39 : vector<32xf32> to vector<32x1xf32>
    %41 = vector.broadcast %40 : vector<32x1xf32> to vector<32x8xf32>
    %42 = arith.divf %38, %41 : vector<32x8xf32>
    %cst_22 = arith.constant dense<0.000000e+00> : vector<32x8xf32>
    %43 = tpu.matmul %42, %18, %cst_22 {dimension_numbers = #tpu.dot_dimension_numbers<[1], [0], [0], [1], [0, 0, 1, 1], [], []>} : vector<32x8xf32>, vector<8x8xf32>, vector<32x8xf32> -> vector<32x8xf32>
    %44 = vector.extract_strided_slice %43 {offsets = [0, 0], sizes = [8, 8], strides = [1, 1]} : vector<32x8xf32> to vector<8x8xf32>
    %45 = vector.extract_strided_slice %43 {offsets = [8, 0], sizes = [8, 8], strides = [1, 1]} : vector<32x8xf32> to vector<8x8xf32>
    %46 = vector.extract_strided_slice %43 {offsets = [16, 0], sizes = [8, 8], strides = [1, 1]} : vector<32x8xf32> to vector<8x8xf32>
    %47 = vector.extract_strided_slice %43 {offsets = [24, 0], sizes = [8, 8], strides = [1, 1]} : vector<32x8xf32> to vector<8x8xf32>
    %48 = tpu.concatenate %44, %45, %46, %47 in 1 : vector<8x8xf32>, vector<8x8xf32>, vector<8x8xf32>, vector<8x8xf32> -> vector<8x32xf32>
    %c0_23 = arith.constant 0 : index
    %c0_24 = arith.constant 0 : index
    %49 = vector.load %arg8[%c0_23, %c0_24] : memref<32x32xf32, #tpu.memory_space<vmem>>, vector<32x32xf32>
    %cst_25 = arith.constant dense<0.000000e+00> : vector<8x32xf32>
    %50 = tpu.matmul %48, %49, %cst_25 {dimension_numbers = #tpu.dot_dimension_numbers<[1], [0], [0], [1], [0, 0, 1, 1], [], []>} : vector<8x32xf32>, vector<32x32xf32>, vector<8x32xf32> -> vector<8x32xf32>
    %c0_26 = arith.constant 0 : index
    %c0_27 = arith.constant 0 : index
    %51 = vector.load %arg9[%c0_26, %c0_27] : memref<1x32xf32, #tpu.memory_space<vmem>>, vector<1x32xf32>
    %52 = vector.broadcast %51 : vector<1x32xf32> to vector<8x32xf32>
    %53 = arith.addf %50, %52 : vector<8x32xf32>
    %54 = arith.addf %53, %1 : vector<8x32xf32>
    %c0_28 = arith.constant 0 : index
    %c0_29 = arith.constant 0 : index
    %55 = vector.load %arg10[%c0_28, %c0_29] : memref<32x256xf32, #tpu.memory_space<vmem>>, vector<32x256xf32>
    %cst_30 = arith.constant dense<0.000000e+00> : vector<8x256xf32>
    %56 = tpu.matmul %54, %55, %cst_30 {dimension_numbers = #tpu.dot_dimension_numbers<[1], [0], [0], [1], [0, 0, 1, 1], [], []>} : vector<8x32xf32>, vector<32x256xf32>, vector<8x256xf32> -> vector<8x256xf32>
    %57 = vector.extract_strided_slice %56 {offsets = [0, 0], sizes = [8, 128], strides = [1, 1]} : vector<8x256xf32> to vector<8x128xf32>
    %58 = vector.extract_strided_slice %56 {offsets = [0, 128], sizes = [8, 128], strides = [1, 1]} : vector<8x256xf32> to vector<8x128xf32>
    %c3 = arith.constant 3 : index
    %c0_31 = arith.constant 0 : index
    %59 = vector.load %arg11[%c3, %c0_31] : memref<4x128xf32, #tpu.memory_space<vmem>>, vector<1x128xf32>
    %60 = vector.broadcast %59 : vector<1x128xf32> to vector<8x128xf32>
    %61 = arith.mulf %60, %57 : vector<8x128xf32>
    %cst_32 = arith.constant 0.000000e+00 : f32
    %62 = vector.broadcast %cst_32 : f32 to vector<1x128xf32>
    %63 = vector.extract_strided_slice %57 {offsets = [0, 0], sizes = [7, 128], strides = [1, 1]} : vector<8x128xf32> to vector<7x128xf32>
    %64 = tpu.concatenate %62, %63 in 0 : vector<1x128xf32>, vector<7x128xf32> -> vector<8x128xf32>
    %c2 = arith.constant 2 : index
    %c0_33 = arith.constant 0 : index
    %65 = vector.load %arg11[%c2, %c0_33] : memref<4x128xf32, #tpu.memory_space<vmem>>, vector<1x128xf32>
    %66 = vector.broadcast %65 : vector<1x128xf32> to vector<8x128xf32>
    %67 = arith.mulf %66, %64 : vector<8x128xf32>
    %68 = arith.addf %61, %67 : vector<8x128xf32>
    %cst_34 = arith.constant 0.000000e+00 : f32
    %69 = vector.broadcast %cst_34 : f32 to vector<2x128xf32>
    %70 = vector.extract_strided_slice %57 {offsets = [0, 0], sizes = [6, 128], strides = [1, 1]} : vector<8x128xf32> to vector<6x128xf32>
    %71 = tpu.concatenate %69, %70 in 0 : vector<2x128xf32>, vector<6x128xf32> -> vector<8x128xf32>
    %c1 = arith.constant 1 : index
    %c0_35 = arith.constant 0 : index
    %72 = vector.load %arg11[%c1, %c0_35] : memref<4x128xf32, #tpu.memory_space<vmem>>, vector<1x128xf32>
    %73 = vector.broadcast %72 : vector<1x128xf32> to vector<8x128xf32>
    %74 = arith.mulf %73, %71 : vector<8x128xf32>
    %75 = arith.addf %68, %74 : vector<8x128xf32>
    %cst_36 = arith.constant 0.000000e+00 : f32
    %76 = vector.broadcast %cst_36 : f32 to vector<3x128xf32>
    %77 = vector.extract_strided_slice %57 {offsets = [0, 0], sizes = [5, 128], strides = [1, 1]} : vector<8x128xf32> to vector<5x128xf32>
    %78 = tpu.concatenate %76, %77 in 0 : vector<3x128xf32>, vector<5x128xf32> -> vector<8x128xf32>
    %c0_37 = arith.constant 0 : index
    %c0_38 = arith.constant 0 : index
    %79 = vector.load %arg11[%c0_37, %c0_38] : memref<4x128xf32, #tpu.memory_space<vmem>>, vector<1x128xf32>
    %80 = vector.broadcast %79 : vector<1x128xf32> to vector<8x128xf32>
    %81 = arith.mulf %80, %78 : vector<8x128xf32>
    %82 = arith.addf %75, %81 : vector<8x128xf32>
    %c0_39 = arith.constant 0 : index
    %c0_40 = arith.constant 0 : index
    %83 = vector.load %arg12[%c0_39, %c0_40] : memref<1x128xf32, #tpu.memory_space<vmem>>, vector<1x128xf32>
    %84 = vector.broadcast %83 : vector<1x128xf32> to vector<8x128xf32>
    %85 = arith.addf %82, %84 : vector<8x128xf32>
    %86 = arith.negf %85 : vector<8x128xf32>
    %87 = math.exp %86 : vector<8x128xf32>
    %cst_41 = arith.constant 1.000000e+00 : f32
    %88 = vector.broadcast %cst_41 : f32 to vector<8x128xf32>
    %89 = arith.addf %88, %87 : vector<8x128xf32>
    %90 = arith.divf %88, %89 : vector<8x128xf32>
    %91 = arith.mulf %85, %90 : vector<8x128xf32>
    %c0_42 = arith.constant 0 : index
    %c0_43 = arith.constant 0 : index
    %92 = vector.load %arg13[%c0_42, %c0_43] : memref<128x2xf32, #tpu.memory_space<vmem>>, vector<128x2xf32>
    %cst_44 = arith.constant dense<0.000000e+00> : vector<8x2xf32>
    %93 = tpu.matmul %91, %92, %cst_44 {dimension_numbers = #tpu.dot_dimension_numbers<[1], [0], [0], [1], [0, 0, 1, 1], [], []>} : vector<8x128xf32>, vector<128x2xf32>, vector<8x2xf32> -> vector<8x2xf32>
    %c0_45 = arith.constant 0 : index
    %c0_46 = arith.constant 0 : index
    %94 = vector.load %arg14[%c0_45, %c0_46] : memref<128x16xf32, #tpu.memory_space<vmem>>, vector<128x16xf32>
    %cst_47 = arith.constant dense<0.000000e+00> : vector<8x16xf32>
    %95 = tpu.matmul %91, %94, %cst_47 {dimension_numbers = #tpu.dot_dimension_numbers<[1], [0], [0], [1], [0, 0, 1, 1], [], []>} : vector<8x128xf32>, vector<128x16xf32>, vector<8x16xf32> -> vector<8x16xf32>
    %c0_48 = arith.constant 0 : index
    %c0_49 = arith.constant 0 : index
    %96 = vector.load %arg15[%c0_48, %c0_49] : memref<128x16xf32, #tpu.memory_space<vmem>>, vector<128x16xf32>
    %cst_50 = arith.constant dense<0.000000e+00> : vector<8x16xf32>
    %97 = tpu.matmul %91, %96, %cst_50 {dimension_numbers = #tpu.dot_dimension_numbers<[1], [0], [0], [1], [0, 0, 1, 1], [], []>} : vector<8x128xf32>, vector<128x16xf32>, vector<8x16xf32> -> vector<8x16xf32>
    %c0_51 = arith.constant 0 : index
    %c0_52 = arith.constant 0 : index
    %98 = vector.load %arg16[%c0_51, %c0_52] : memref<2x128xf32, #tpu.memory_space<vmem>>, vector<2x128xf32>
    %cst_53 = arith.constant dense<0.000000e+00> : vector<8x128xf32>
    %99 = tpu.matmul %93, %98, %cst_53 {dimension_numbers = #tpu.dot_dimension_numbers<[1], [0], [0], [1], [0, 0, 1, 1], [], []>} : vector<8x2xf32>, vector<2x128xf32>, vector<8x128xf32> -> vector<8x128xf32>
    %c0_54 = arith.constant 0 : index
    %c0_55 = arith.constant 0 : index
    %100 = vector.load %arg17[%c0_54, %c0_55] : memref<1x128xf32, #tpu.memory_space<vmem>>, vector<1x128xf32>
    %101 = vector.broadcast %100 : vector<1x128xf32> to vector<8x128xf32>
    %102 = arith.addf %99, %101 : vector<8x128xf32>
    %cst_56 = arith.constant 0.000000e+00 : f32
    %103 = vector.broadcast %cst_56 : f32 to vector<8x128xf32>
    %104 = arith.maximumf %102, %103 : vector<8x128xf32>
    %105 = vector.broadcast %cst_56 : f32 to vector<8x128xf32>
    %106 = arith.subf %102, %105 : vector<8x128xf32>
    %107 = arith.cmpf one, %106, %106 : vector<8x128xf32>
    %108 = vector.broadcast %cst_56 : f32 to vector<8x128xf32>
    %109 = arith.addf %102, %108 : vector<8x128xf32>
    %110 = math.absf %106 : vector<8x128xf32>
    %cst_57 = arith.constant 0.000000e+00 : f32
    %111 = vector.broadcast %cst_57 : f32 to vector<8x128xf32>
    %112 = arith.subf %111, %110 : vector<8x128xf32>
    %113 = math.exp %112 : vector<8x128xf32>
    %114 = math.log1p %113 : vector<8x128xf32>
    %115 = arith.addf %104, %114 : vector<8x128xf32>
    %116 = arith.select %107, %109, %115 : vector<8x128xi1>, vector<8x128xf32>
    %c0_58 = arith.constant 0 : index
    %c0_59 = arith.constant 0 : index
    %117 = vector.load %arg18[%c0_58, %c0_59] : memref<16x128xf32, #tpu.memory_space<vmem>>, vector<16x128xf32>
    %c0_60 = arith.constant 0 : index
    %c0_61 = arith.constant 0 : index
    %118 = vector.load %arg22[%c0_60, %c0_61] : memref<8x128xf32, #tpu.memory_space<vmem>>, vector<8x128xf32>
    tpu.vector_store %arg22[%c0_60, %c0_61], %91 {strides = array<i32>} : memref<8x128xf32, #tpu.memory_space<vmem>>, vector<8x128xf32>,
    %c0_62 = arith.constant 0 : index
    %c0_63 = arith.constant 0 : index
    %119 = vector.load %arg23[%c0_62, %c0_63] : memref<8x128xf32, #tpu.memory_space<vmem>>, vector<8x128xf32>
    tpu.vector_store %arg23[%c0_62, %c0_63], %116 {strides = array<i32>} : memref<8x128xf32, #tpu.memory_space<vmem>>, vector<8x128xf32>,
    %c0_64 = arith.constant 0 : index
    %c0_65 = arith.constant 0 : index
    %120 = vector.load %arg24[%c0_64, %c0_65] : memref<8x16xf32, #tpu.memory_space<vmem>>, vector<8x16xf32>
    tpu.vector_store %arg24[%c0_64, %c0_65], %95 {strides = array<i32>} : memref<8x16xf32, #tpu.memory_space<vmem>>, vector<8x16xf32>,
    %c0_66 = arith.constant 0 : index
    %c0_67 = arith.constant 0 : index
    %121 = vector.load %arg25[%c0_66, %c0_67] : memref<8x16xf32, #tpu.memory_space<vmem>>, vector<8x16xf32>
    tpu.vector_store %arg25[%c0_66, %c0_67], %97 {strides = array<i32>} : memref<8x16xf32, #tpu.memory_space<vmem>>, vector<8x16xf32>,
    %cst_68 = arith.constant 0.000000e+00 : f32
    %122 = vector.broadcast %cst_68 : f32 to vector<16x128xf32>
    %c0_69 = arith.constant 0 : index
    %c0_70 = arith.constant 0 : index
    %123 = vector.load %arg27[%c0_69, %c0_70] : memref<16x128xf32, #tpu.memory_space<vmem>>, vector<16x128xf32>
    tpu.vector_store %arg27[%c0_69, %c0_70], %122 {strides = array<i32>} : memref<16x128xf32, #tpu.memory_space<vmem>>, vector<16x128xf32>,
    %c0_i32 = arith.constant 0 : i32
    %c1_i32 = arith.constant 1 : i32
    %124 = arith.muli %c0_i32, %c1_i32 : i32
    %c0_i32_71 = arith.constant 0 : i32
    %125 = arith.addi %c0_i32_71, %124 : i32
    %c8_i32 = arith.constant 8 : i32
    %126 = arith.muli %125, %c8_i32 : i32
    %127 = tpu.assume_multiple %126, 8 : i32
    %128 = arith.index_cast %127 : i32 to index
    %c0_72 = arith.constant 0 : index
    %129 = vector.load %arg23[%128, %c0_72] : memref<8x128xf32, #tpu.memory_space<vmem>>, vector<8x128xf32>
    %130 = arith.index_cast %127 : i32 to index
    %c0_73 = arith.constant 0 : index
    %131 = vector.load %arg22[%130, %c0_73] : memref<8x128xf32, #tpu.memory_space<vmem>>, vector<8x128xf32>
    %132 = arith.mulf %129, %131 : vector<8x128xf32>
    %133 = arith.index_cast %127 : i32 to index
    %c0_74 = arith.constant 0 : index
    %134 = vector.load %arg24[%133, %c0_74] : memref<8x16xf32, #tpu.memory_space<vmem>>, vector<8x16xf32>
    %135 = tpu.transpose %134, [1, 0] : vector<8x16xf32> -> vector<16x8xf32>
    %136 = arith.index_cast %127 : i32 to index
    %c0_75 = arith.constant 0 : index
    %137 = vector.load %arg25[%136, %c0_75] : memref<8x16xf32, #tpu.memory_space<vmem>>, vector<8x16xf32>
    %138 = tpu.transpose %137, [1, 0] : vector<8x16xf32> -> vector<16x8xf32>
    %c0_76 = arith.constant 0 : index
    %c0_77 = arith.constant 0 : index
    %139 = vector.load %arg27[%c0_76, %c0_77] : memref<16x128xf32, #tpu.memory_space<vmem>>, vector<16x128xf32>
    %140 = vector.extract_strided_slice %129 {offsets = [0, 0], sizes = [1, 128], strides = [1, 1]} : vector<8x128xf32> to vector<1x128xf32>
    %141 = vector.broadcast %140 : vector<1x128xf32> to vector<16x128xf32>
    %142 = arith.mulf %141, %117 : vector<16x128xf32>
    %143 = math.exp %142 : vector<16x128xf32>
    %144 = vector.extract_strided_slice %132 {offsets = [0, 0], sizes = [1, 128], strides = [1, 1]} : vector<8x128xf32> to vector<1x128xf32>
    %145 = vector.extract_strided_slice %135 {offsets = [0, 0], sizes = [16, 1], strides = [1, 1]} : vector<16x8xf32> to vector<16x1xf32>
    %146 = vector.broadcast %144 : vector<1x128xf32> to vector<16x128xf32>
    %147 = vector.broadcast %145 : vector<16x1xf32> to vector<16x128xf32>
    %148 = arith.mulf %146, %147 : vector<16x128xf32>
    %149 = arith.mulf %143, %139 : vector<16x128xf32>
    %150 = arith.addf %149, %148 : vector<16x128xf32>
    %151 = vector.extract_strided_slice %138 {offsets = [0, 0], sizes = [16, 1], strides = [1, 1]} : vector<16x8xf32> to vector<16x1xf32>
    %152 = vector.broadcast %151 : vector<16x1xf32> to vector<16x128xf32>
    %153 = arith.mulf %150, %152 : vector<16x128xf32>
    %cst_78 = arith.constant dense<0.000000e+00> : vector<128xf32>
    %154 = vector.multi_reduction <add>, %153, %cst_78 [0] : vector<16x128xf32> to vector<128xf32>
    %155 = vector.shape_cast %154 : vector<128xf32> to vector<1x128xf32>
    %156 = vector.extract_strided_slice %129 {offsets = [1, 0], sizes = [1, 128], strides = [1, 1]} : vector<8x128xf32> to vector<1x128xf32>
    %157 = vector.broadcast %156 : vector<1x128xf32> to vector<16x128xf32>
    %158 = arith.mulf %157, %117 : vector<16x128xf32>
    %159 = math.exp %158 : vector<16x128xf32>
    %160 = vector.extract_strided_slice %132 {offsets = [1, 0], sizes = [1, 128], strides = [1, 1]} : vector<8x128xf32> to vector<1x128xf32>
    %161 = vector.extract_strided_slice %135 {offsets = [0, 1], sizes = [16, 1], strides = [1, 1]} : vector<16x8xf32> to vector<16x1xf32>
    %162 = vector.broadcast %160 : vector<1x128xf32> to vector<16x128xf32>
    %163 = vector.broadcast %161 : vector<16x1xf32> to vector<16x128xf32>
    %164 = arith.mulf %162, %163 : vector<16x128xf32>
    %165 = arith.mulf %159, %150 : vector<16x128xf32>
    %166 = arith.addf %165, %164 : vector<16x128xf32>
    %167 = vector.extract_strided_slice %138 {offsets = [0, 1], sizes = [16, 1], strides = [1, 1]} : vector<16x8xf32> to vector<16x1xf32>
    %168 = vector.broadcast %167 : vector<16x1xf32> to vector<16x128xf32>
    %169 = arith.mulf %166, %168 : vector<16x128xf32>
    %cst_79 = arith.constant dense<0.000000e+00> : vector<128xf32>
    %170 = vector.multi_reduction <add>, %169, %cst_79 [0] : vector<16x128xf32> to vector<128xf32>
    %171 = vector.shape_cast %170 : vector<128xf32> to vector<1x128xf32>
    %172 = vector.extract_strided_slice %129 {offsets = [2, 0], sizes = [1, 128], strides = [1, 1]} : vector<8x128xf32> to vector<1x128xf32>
    %173 = vector.broadcast %172 : vector<1x128xf32> to vector<16x128xf32>
    %174 = arith.mulf %173, %117 : vector<16x128xf32>
    %175 = math.exp %174 : vector<16x128xf32>
    %176 = vector.extract_strided_slice %132 {offsets = [2, 0], sizes = [1, 128], strides = [1, 1]} : vector<8x128xf32> to vector<1x128xf32>
    %177 = vector.extract_strided_slice %135 {offsets = [0, 2], sizes = [16, 1], strides = [1, 1]} : vector<16x8xf32> to vector<16x1xf32>
    %178 = vector.broadcast %176 : vector<1x128xf32> to vector<16x128xf32>
    %179 = vector.broadcast %177 : vector<16x1xf32> to vector<16x128xf32>
    %180 = arith.mulf %178, %179 : vector<16x128xf32>
    %181 = arith.mulf %175, %166 : vector<16x128xf32>
    %182 = arith.addf %181, %180 : vector<16x128xf32>
    %183 = vector.extract_strided_slice %138 {offsets = [0, 2], sizes = [16, 1], strides = [1, 1]} : vector<16x8xf32> to vector<16x1xf32>
    %184 = vector.broadcast %183 : vector<16x1xf32> to vector<16x128xf32>
    %185 = arith.mulf %182, %184 : vector<16x128xf32>
    %cst_80 = arith.constant dense<0.000000e+00> : vector<128xf32>
    %186 = vector.multi_reduction <add>, %185, %cst_80 [0] : vector<16x128xf32> to vector<128xf32>
    %187 = vector.shape_cast %186 : vector<128xf32> to vector<1x128xf32>
    %188 = vector.extract_strided_slice %129 {offsets = [3, 0], sizes = [1, 128], strides = [1, 1]} : vector<8x128xf32> to vector<1x128xf32>
    %189 = vector.broadcast %188 : vector<1x128xf32> to vector<16x128xf32>
    %190 = arith.mulf %189, %117 : vector<16x128xf32>
    %191 = math.exp %190 : vector<16x128xf32>
    %192 = vector.extract_strided_slice %132 {offsets = [3, 0], sizes = [1, 128], strides = [1, 1]} : vector<8x128xf32> to vector<1x128xf32>
    %193 = vector.extract_strided_slice %135 {offsets = [0, 3], sizes = [16, 1], strides = [1, 1]} : vector<16x8xf32> to vector<16x1xf32>
    %194 = vector.broadcast %192 : vector<1x128xf32> to vector<16x128xf32>
    %195 = vector.broadcast %193 : vector<16x1xf32> to vector<16x128xf32>
    %196 = arith.mulf %194, %195 : vector<16x128xf32>
    %197 = arith.mulf %191, %182 : vector<16x128xf32>
    %198 = arith.addf %197, %196 : vector<16x128xf32>
    %199 = vector.extract_strided_slice %138 {offsets = [0, 3], sizes = [16, 1], strides = [1, 1]} : vector<16x8xf32> to vector<16x1xf32>
    %200 = vector.broadcast %199 : vector<16x1xf32> to vector<16x128xf32>
    %201 = arith.mulf %198, %200 : vector<16x128xf32>
    %cst_81 = arith.constant dense<0.000000e+00> : vector<128xf32>
    %202 = vector.multi_reduction <add>, %201, %cst_81 [0] : vector<16x128xf32> to vector<128xf32>
    %203 = vector.shape_cast %202 : vector<128xf32> to vector<1x128xf32>
    %204 = vector.extract_strided_slice %129 {offsets = [4, 0], sizes = [1, 128], strides = [1, 1]} : vector<8x128xf32> to vector<1x128xf32>
    %205 = vector.broadcast %204 : vector<1x128xf32> to vector<16x128xf32>
    %206 = arith.mulf %205, %117 : vector<16x128xf32>
    %207 = math.exp %206 : vector<16x128xf32>
    %208 = vector.extract_strided_slice %132 {offsets = [4, 0], sizes = [1, 128], strides = [1, 1]} : vector<8x128xf32> to vector<1x128xf32>
    %209 = vector.extract_strided_slice %135 {offsets = [0, 4], sizes = [16, 1], strides = [1, 1]} : vector<16x8xf32> to vector<16x1xf32>
    %210 = vector.broadcast %208 : vector<1x128xf32> to vector<16x128xf32>
    %211 = vector.broadcast %209 : vector<16x1xf32> to vector<16x128xf32>
    %212 = arith.mulf %210, %211 : vector<16x128xf32>
    %213 = arith.mulf %207, %198 : vector<16x128xf32>
    %214 = arith.addf %213, %212 : vector<16x128xf32>
    %215 = vector.extract_strided_slice %138 {offsets = [0, 4], sizes = [16, 1], strides = [1, 1]} : vector<16x8xf32> to vector<16x1xf32>
    %216 = vector.broadcast %215 : vector<16x1xf32> to vector<16x128xf32>
    %217 = arith.mulf %214, %216 : vector<16x128xf32>
    %cst_82 = arith.constant dense<0.000000e+00> : vector<128xf32>
    %218 = vector.multi_reduction <add>, %217, %cst_82 [0] : vector<16x128xf32> to vector<128xf32>
    %219 = vector.shape_cast %218 : vector<128xf32> to vector<1x128xf32>
    %220 = vector.extract_strided_slice %129 {offsets = [5, 0], sizes = [1, 128], strides = [1, 1]} : vector<8x128xf32> to vector<1x128xf32>
    %221 = vector.broadcast %220 : vector<1x128xf32> to vector<16x128xf32>
    %222 = arith.mulf %221, %117 : vector<16x128xf32>
    %223 = math.exp %222 : vector<16x128xf32>
    %224 = vector.extract_strided_slice %132 {offsets = [5, 0], sizes = [1, 128], strides = [1, 1]} : vector<8x128xf32> to vector<1x128xf32>
    %225 = vector.extract_strided_slice %135 {offsets = [0, 5], sizes = [16, 1], strides = [1, 1]} : vector<16x8xf32> to vector<16x1xf32>
    %226 = vector.broadcast %224 : vector<1x128xf32> to vector<16x128xf32>
    %227 = vector.broadcast %225 : vector<16x1xf32> to vector<16x128xf32>
    %228 = arith.mulf %226, %227 : vector<16x128xf32>
    %229 = arith.mulf %223, %214 : vector<16x128xf32>
    %230 = arith.addf %229, %228 : vector<16x128xf32>
    %231 = vector.extract_strided_slice %138 {offsets = [0, 5], sizes = [16, 1], strides = [1, 1]} : vector<16x8xf32> to vector<16x1xf32>
    %232 = vector.broadcast %231 : vector<16x1xf32> to vector<16x128xf32>
    %233 = arith.mulf %230, %232 : vector<16x128xf32>
    %cst_83 = arith.constant dense<0.000000e+00> : vector<128xf32>
    %234 = vector.multi_reduction <add>, %233, %cst_83 [0] : vector<16x128xf32> to vector<128xf32>
    %235 = vector.shape_cast %234 : vector<128xf32> to vector<1x128xf32>
    %236 = vector.extract_strided_slice %129 {offsets = [6, 0], sizes = [1, 128], strides = [1, 1]} : vector<8x128xf32> to vector<1x128xf32>
    %237 = vector.broadcast %236 : vector<1x128xf32> to vector<16x128xf32>
    %238 = arith.mulf %237, %117 : vector<16x128xf32>
    %239 = math.exp %238 : vector<16x128xf32>
    %240 = vector.extract_strided_slice %132 {offsets = [6, 0], sizes = [1, 128], strides = [1, 1]} : vector<8x128xf32> to vector<1x128xf32>
    %241 = vector.extract_strided_slice %135 {offsets = [0, 6], sizes = [16, 1], strides = [1, 1]} : vector<16x8xf32> to vector<16x1xf32>
    %242 = vector.broadcast %240 : vector<1x128xf32> to vector<16x128xf32>
    %243 = vector.broadcast %241 : vector<16x1xf32> to vector<16x128xf32>
    %244 = arith.mulf %242, %243 : vector<16x128xf32>
    %245 = arith.mulf %239, %230 : vector<16x128xf32>
    %246 = arith.addf %245, %244 : vector<16x128xf32>
    %247 = vector.extract_strided_slice %138 {offsets = [0, 6], sizes = [16, 1], strides = [1, 1]} : vector<16x8xf32> to vector<16x1xf32>
    %248 = vector.broadcast %247 : vector<16x1xf32> to vector<16x128xf32>
    %249 = arith.mulf %246, %248 : vector<16x128xf32>
    %cst_84 = arith.constant dense<0.000000e+00> : vector<128xf32>
    %250 = vector.multi_reduction <add>, %249, %cst_84 [0] : vector<16x128xf32> to vector<128xf32>
    %251 = vector.shape_cast %250 : vector<128xf32> to vector<1x128xf32>
    %252 = vector.extract_strided_slice %129 {offsets = [7, 0], sizes = [1, 128], strides = [1, 1]} : vector<8x128xf32> to vector<1x128xf32>
    %253 = vector.broadcast %252 : vector<1x128xf32> to vector<16x128xf32>
    %254 = arith.mulf %253, %117 : vector<16x128xf32>
    %255 = math.exp %254 : vector<16x128xf32>
    %256 = vector.extract_strided_slice %132 {offsets = [7, 0], sizes = [1, 128], strides = [1, 1]} : vector<8x128xf32> to vector<1x128xf32>
    %257 = vector.extract_strided_slice %135 {offsets = [0, 7], sizes = [16, 1], strides = [1, 1]} : vector<16x8xf32> to vector<16x1xf32>
    %258 = vector.broadcast %256 : vector<1x128xf32> to vector<16x128xf32>
    %259 = vector.broadcast %257 : vector<16x1xf32> to vector<16x128xf32>
    %260 = arith.mulf %258, %259 : vector<16x128xf32>
    %261 = arith.mulf %255, %246 : vector<16x128xf32>
    %262 = arith.addf %261, %260 : vector<16x128xf32>
    %263 = vector.extract_strided_slice %138 {offsets = [0, 7], sizes = [16, 1], strides = [1, 1]} : vector<16x8xf32> to vector<16x1xf32>
    %264 = vector.broadcast %263 : vector<16x1xf32> to vector<16x128xf32>
    %265 = arith.mulf %262, %264 : vector<16x128xf32>
    %cst_85 = arith.constant dense<0.000000e+00> : vector<128xf32>
    %266 = vector.multi_reduction <add>, %265, %cst_85 [0] : vector<16x128xf32> to vector<128xf32>
    %267 = vector.shape_cast %266 : vector<128xf32> to vector<1x128xf32>
    %c0_86 = arith.constant 0 : index
    %c0_87 = arith.constant 0 : index
    %268 = vector.load %arg27[%c0_86, %c0_87] : memref<16x128xf32, #tpu.memory_space<vmem>>, vector<16x128xf32>
    tpu.vector_store %arg27[%c0_86, %c0_87], %262 {strides = array<i32>} : memref<16x128xf32, #tpu.memory_space<vmem>>, vector<16x128xf32>,
    %269 = tpu.concatenate %155, %171, %187, %203, %219, %235, %251, %267 in 0 : vector<1x128xf32>, vector<1x128xf32>, vector<1x128xf32>, vector<1x128xf32>, vector<1x128xf32>, vector<1x128xf32>, vector<1x128xf32>, vector<1x128xf32> -> vector<8x128xf32>
    %270 = arith.index_cast %127 : i32 to index
    %c0_88 = arith.constant 0 : index
    %271 = vector.load %arg26[%270, %c0_88] : memref<8x128xf32, #tpu.memory_space<vmem>>, vector<8x128xf32>
    tpu.vector_store %arg26[%270, %c0_88], %269 {strides = array<i32>} : memref<8x128xf32, #tpu.memory_space<vmem>>, vector<8x128xf32>,
    %c1_i32_89 = arith.constant 1 : i32
    %c0_90 = arith.constant 0 : index
    %c0_91 = arith.constant 0 : index
    %272 = vector.load %arg26[%c0_90, %c0_91] : memref<8x128xf32, #tpu.memory_space<vmem>>, vector<8x128xf32>
    %c0_92 = arith.constant 0 : index
    %c0_93 = arith.constant 0 : index
    %273 = vector.load %arg19[%c0_92, %c0_93] : memref<1x128xf32, #tpu.memory_space<vmem>>, vector<1x128xf32>
    %274 = vector.broadcast %273 : vector<1x128xf32> to vector<8x128xf32>
    %275 = arith.mulf %91, %274 : vector<8x128xf32>
    %276 = arith.addf %272, %275 : vector<8x128xf32>
    %277 = arith.negf %58 : vector<8x128xf32>
    %278 = math.exp %277 : vector<8x128xf32>
    %cst_94 = arith.constant 1.000000e+00 : f32
    %279 = vector.broadcast %cst_94 : f32 to vector<8x128xf32>
    %280 = arith.addf %279, %278 : vector<8x128xf32>
    %281 = arith.divf %279, %280 : vector<8x128xf32>
    %282 = arith.mulf %58, %281 : vector<8x128xf32>
    %283 = arith.mulf %276, %282 : vector<8x128xf32>
    %c0_95 = arith.constant 0 : index
    %c0_96 = arith.constant 0 : index
    %284 = vector.load %arg20[%c0_95, %c0_96] : memref<128x32xf32, #tpu.memory_space<vmem>>, vector<128x32xf32>
    %cst_97 = arith.constant dense<0.000000e+00> : vector<8x32xf32>
    %285 = tpu.matmul %283, %284, %cst_97 {dimension_numbers = #tpu.dot_dimension_numbers<[1], [0], [0], [1], [0, 0, 1, 1], [], []>} : vector<8x128xf32>, vector<128x32xf32>, vector<8x32xf32> -> vector<8x32xf32>
    %286 = arith.addf %285, %54 : vector<8x32xf32>
    %c0_98 = arith.constant 0 : index
    %c0_99 = arith.constant 0 : index
    %c0_100 = arith.constant 0 : index
    %287 = vector.load %arg21[%c0_98, %c0_99, %c0_100] : memref<1x8x32xf32, #tpu.memory_space<vmem>>, vector<1x8x32xf32>
    %288 = vector.shape_cast %287 : vector<1x8x32xf32> to vector<8x32xf32>
    %289 = vector.shape_cast %286 : vector<8x32xf32> to vector<1x8x32xf32>
    tpu.vector_store %arg21[%c0_98, %c0_99, %c0_100], %289 {strides = array<i32>} : memref<1x8x32xf32, #tpu.memory_space<vmem>>, vector<1x8x32xf32>,
    return
  }
  func.func @transform_0(%arg0: i32) -> (i32, i32, i32) {
    %c0_i32 = arith.constant 0 : i32
    %c0_i32_0 = arith.constant 0 : i32
    %c0_i32_1 = arith.constant 0 : i32
    return %arg0, %c0_i32, %c0_i32_0 : i32, i32, i32
  }
  func.func @transform_1(%arg0: i32) -> (i32, i32) {
    %c0_i32 = arith.constant 0 : i32
    %c0_i32_0 = arith.constant 0 : i32
    %c0_i32_1 = arith.constant 0 : i32
    return %c0_i32, %c0_i32_0 : i32, i32
  }
  func.func @transform_2(%arg0: i32) -> (i32, i32) {
    %c0_i32 = arith.constant 0 : i32
    %c0_i32_0 = arith.constant 0 : i32
    %c0_i32_1 = arith.constant 0 : i32
    return %c0_i32, %c0_i32_0 : i32, i32
  }
  func.func @transform_3(%arg0: i32) -> (i32, i32) {
    %c0_i32 = arith.constant 0 : i32
    %c0_i32_0 = arith.constant 0 : i32
    %c0_i32_1 = arith.constant 0 : i32
    return %c0_i32, %c0_i32_0 : i32, i32
  }
  func.func @transform_4(%arg0: i32) -> (i32, i32) {
    %c0_i32 = arith.constant 0 : i32
    %c0_i32_0 = arith.constant 0 : i32
    %c0_i32_1 = arith.constant 0 : i32
    return %c0_i32, %c0_i32_0 : i32, i32
  }
  func.func @transform_5(%arg0: i32) -> (i32, i32) {
    %c0_i32 = arith.constant 0 : i32
    %c0_i32_0 = arith.constant 0 : i32
    %c0_i32_1 = arith.constant 0 : i32
    return %c0_i32, %c0_i32_0 : i32, i32
  }
  func.func @transform_6(%arg0: i32) -> (i32, i32) {
    %c0_i32 = arith.constant 0 : i32
    %c0_i32_0 = arith.constant 0 : i32
    %c0_i32_1 = arith.constant 0 : i32
    return %c0_i32, %c0_i32_0 : i32, i32
  }
  func.func @transform_7(%arg0: i32) -> (i32, i32) {
    %c0_i32 = arith.constant 0 : i32
    %c0_i32_0 = arith.constant 0 : i32
    %c0_i32_1 = arith.constant 0 : i32
    return %c0_i32, %c0_i32_0 : i32, i32
  }
  func.func @transform_8(%arg0: i32) -> (i32, i32) {
    %c0_i32 = arith.constant 0 : i32
    %c0_i32_0 = arith.constant 0 : i32
    %c0_i32_1 = arith.constant 0 : i32
    return %c0_i32, %c0_i32_0 : i32, i32
  }
  func.func @transform_9(%arg0: i32) -> (i32, i32) {
    %c0_i32 = arith.constant 0 : i32
    %c0_i32_0 = arith.constant 0 : i32
    %c0_i32_1 = arith.constant 0 : i32
    return %c0_i32, %c0_i32_0 : i32, i32
  }
  func.func @transform_10(%arg0: i32) -> (i32, i32) {
    %c0_i32 = arith.constant 0 : i32
    %c0_i32_0 = arith.constant 0 : i32
    %c0_i32_1 = arith.constant 0 : i32
    return %c0_i32, %c0_i32_0 : i32, i32
  }
  func.func @transform_11(%arg0: i32) -> (i32, i32) {
    %c0_i32 = arith.constant 0 : i32
    %c0_i32_0 = arith.constant 0 : i32
    %c0_i32_1 = arith.constant 0 : i32
    return %c0_i32, %c0_i32_0 : i32, i32
  }
  func.func @transform_12(%arg0: i32) -> (i32, i32) {
    %c0_i32 = arith.constant 0 : i32
    %c0_i32_0 = arith.constant 0 : i32
    %c0_i32_1 = arith.constant 0 : i32
    return %c0_i32, %c0_i32_0 : i32, i32
  }
  func.func @transform_13(%arg0: i32) -> (i32, i32) {
    %c0_i32 = arith.constant 0 : i32
    %c0_i32_0 = arith.constant 0 : i32
    %c0_i32_1 = arith.constant 0 : i32
    return %c0_i32, %c0_i32_0 : i32, i32
  }
  func.func @transform_14(%arg0: i32) -> (i32, i32) {
    %c0_i32 = arith.constant 0 : i32
    %c0_i32_0 = arith.constant 0 : i32
    %c0_i32_1 = arith.constant 0 : i32
    return %c0_i32, %c0_i32_0 : i32, i32
  }
  func.func @transform_15(%arg0: i32) -> (i32, i32) {
    %c0_i32 = arith.constant 0 : i32
    %c0_i32_0 = arith.constant 0 : i32
    %c0_i32_1 = arith.constant 0 : i32
    return %c0_i32, %c0_i32_0 : i32, i32
  }
  func.func @transform_16(%arg0: i32) -> (i32, i32) {
    %c0_i32 = arith.constant 0 : i32
    %c0_i32_0 = arith.constant 0 : i32
    %c0_i32_1 = arith.constant 0 : i32
    return %c0_i32, %c0_i32_0 : i32, i32
  }
  func.func @transform_17(%arg0: i32) -> (i32, i32) {
    %c0_i32 = arith.constant 0 : i32
    %c0_i32_0 = arith.constant 0 : i32
    %c0_i32_1 = arith.constant 0 : i32
    return %c0_i32, %c0_i32_0 : i32, i32
  }
  func.func @transform_18(%arg0: i32) -> (i32, i32) {
    %c0_i32 = arith.constant 0 : i32
    %c0_i32_0 = arith.constant 0 : i32
    %c0_i32_1 = arith.constant 0 : i32
    return %c0_i32, %c0_i32_0 : i32, i32
  }
  func.func @transform_19(%arg0: i32) -> (i32, i32) {
    %c0_i32 = arith.constant 0 : i32
    %c0_i32_0 = arith.constant 0 : i32
    %c0_i32_1 = arith.constant 0 : i32
    return %c0_i32, %c0_i32_0 : i32, i32
  }
  func.func @transform_20(%arg0: i32) -> (i32, i32, i32) {
    %c0_i32 = arith.constant 0 : i32
    %c0_i32_0 = arith.constant 0 : i32
    %c0_i32_1 = arith.constant 0 : i32
    return %arg0, %c0_i32, %c0_i32_0 : i32, i32, i32
  }
}

</mosaic_0001>

<llo_original>
// kernel: tpu_custom_call.1
$region0: #{tpu_custom_call.1}
  #allocation0 [shape = 'u32[]', space=smem, size = 0x4, offset = 0x4, fixed_abs, tag = 'smem constant byte address 0x4 - core index']
  #allocation1 [shape = 'u32[72,128]{1,0:T(1,128)}', space=vmem, size = 0x9000, scoped, tag = 'internal scratch']
  #allocation2 [shape = 'f32[8,128]{1,0:T(8,128)}', space=vmem, size = 0x1000, scoped, tag = 'scratch operand']
  #allocation3 [shape = 'f32[8,128]{1,0:T(8,128)}', space=vmem, size = 0x1000, scoped, tag = 'scratch operand']
  #allocation4 [shape = 'f32[8,16]{1,0:T(8,128)}', space=vmem, size = 0x1000, scoped, tag = 'scratch operand']
  #allocation5 [shape = 'f32[8,16]{1,0:T(8,128)}', space=vmem, size = 0x1000, scoped, tag = 'scratch operand']
  #allocation6 [shape = 'f32[8,128]{1,0:T(8,128)}', space=vmem, size = 0x1000, scoped, tag = 'scratch operand']
  #allocation7 [shape = 'f32[16,128]{1,0:T(8,128)}', space=vmem, size = 0x2000, scoped, tag = 'scratch operand']
  %s0 = inlined_call_operand.vmem [shape: f32[2,8,32], index: 0, kind: input, shape index: {}]
  %s1 = inlined_call_operand.vmem [shape: f32[32,32], index: 1, kind: input, shape index: {}]
  %s2 = inlined_call_operand.vmem [shape: f32[1,32], index: 2, kind: input, shape index: {}]
  %s3 = inlined_call_operand.vmem [shape: f32[32,8], index: 3, kind: input, shape index: {}]
  %s4 = inlined_call_operand.vmem [shape: f32[1,8], index: 4, kind: input, shape index: {}]
  %s5 = inlined_call_operand.vmem [shape: f32[32,8], index: 5, kind: input, shape index: {}]
  %s6 = inlined_call_operand.vmem [shape: f32[1,8], index: 6, kind: input, shape index: {}]
  %s7 = inlined_call_operand.vmem [shape: f32[32,32], index: 7, kind: input, shape index: {}]
  %s8 = inlined_call_operand.vmem [shape: f32[1,32], index: 8, kind: input, shape index: {}]
  %s9 = inlined_call_operand.vmem [shape: f32[32,256], index: 9, kind: input, shape index: {}]
  %s10 = inlined_call_operand.vmem [shape: f32[4,128], index: 10, kind: input, shape index: {}]
  %s11 = inlined_call_operand.vmem [shape: f32[1,128], index: 11, kind: input, shape index: {}]
  %s12 = inlined_call_operand.vmem [shape: f32[128,2], index: 12, kind: input, shape index: {}]
  %s13 = inlined_call_operand.vmem [shape: f32[128,16], index: 13, kind: input, shape index: {}]
  %s14 = inlined_call_operand.vmem [shape: f32[128,16], index: 14, kind: input, shape index: {}]
  %s15 = inlined_call_operand.vmem [shape: f32[2,128], index: 15, kind: input, shape index: {}]
  %s16 = inlined_call_operand.vmem [shape: f32[1,128], index: 16, kind: input, shape index: {}]
  %s17 = inlined_call_operand.vmem [shape: f32[16,128], index: 17, kind: input, shape index: {}]
  %s18 = inlined_call_operand.vmem [shape: f32[1,128], index: 18, kind: input, shape index: {}]
  %s19 = inlined_call_operand.vmem [shape: f32[128,32], index: 19, kind: input, shape index: {}]
  %s20 = inlined_call_operand.hbm [shape: f32[2,8,32], index: 20, kind: output, shape index: {}]
  %s21 = sld [smem:[#allocation0]]
  $region113: #{tpu_custom_call.1} parent=0
    _
  %s23 = ssub.s32 1, %s21
  %s24 = scalar_select 0, %s23, %s21
  $region1: #{tpu_custom_call.1} parent=0
    #allocation8 [shape = 'u8[8192]{0}', space=vmem, size = 0x2000, scoped, tag = 'output window, operand 0']
    #allocation9 [shape = 's32[2]{0}', space=sflag, size = 0x8, scoped, tag = 'scoped memory for tpu_custom_call.1']
    %25 = vsyncpa [#allocation9], 0
    %s26 = scalar_lea.sflag [#allocation9], 1
    %27 = vsyncpa %s26, 0
    loop: start=0, step=1, limit=4
    $region2: #{tpu_custom_call.1} parent=1 // loop_pre_header
      _
    $region3: #{tpu_custom_call.1} parent=1 // loop_header
      %s29 = sphi 0, %s33
      %p30 = scmp.ge.s32.totalorder %s29, 4
      %s39 = sphi 0, %s41
      %s42 = sphi 0, %s39
      %s43 = sphi 0, %s42
      %s59 = sphi 0, %s43
      %s63 = sphi 0, %s63
      %s65 = sphi 0, %s63
      %s66 = sphi 0, %s65
      %s80 = sphi 0, %s66
      %s84 = sphi 0, %s84
      %s86 = sphi 0, %s84
      %s87 = sphi 0, %s86
      %s101 = sphi 0, %s87
      %s105 = sphi 0, %s105
      %s107 = sphi 0, %s105
      %s108 = sphi 0, %s107
      %s122 = sphi 0, %s108
      %s126 = sphi 0, %s126
      %s128 = sphi 0, %s126
      %s129 = sphi 0, %s128
      %s143 = sphi 0, %s129
      %s147 = sphi 0, %s147
      %s149 = sphi 0, %s147
      %s150 = sphi 0, %s149
      %s164 = sphi 0, %s150
      %s168 = sphi 0, %s168
      %s170 = sphi 0, %s168
      %s171 = sphi 0, %s170
      %s185 = sphi 0, %s171
      %s189 = sphi 0, %s189
      %s191 = sphi 0, %s189
      %s192 = sphi 0, %s191
      %s206 = sphi 0, %s192
      %s210 = sphi 0, %s210
      %s212 = sphi 0, %s210
      %s213 = sphi 0, %s212
      %s227 = sphi 0, %s213
      %s231 = sphi 0, %s231
      %s233 = sphi 0, %s231
      %s234 = sphi 0, %s233
      %s248 = sphi 0, %s234
      %s252 = sphi 0, %s252
      %s254 = sphi 0, %s252
      %s255 = sphi 0, %s254
      %s269 = sphi 0, %s255
      %s273 = sphi 0, %s273
      %s275 = sphi 0, %s273
      %s276 = sphi 0, %s275
      %s290 = sphi 0, %s276
      %s294 = sphi 0, %s294
      %s296 = sphi 0, %s294
      %s297 = sphi 0, %s296
      %s311 = sphi 0, %s297
      %s315 = sphi 0, %s315
      %s317 = sphi 0, %s315
      %s318 = sphi 0, %s317
      %s332 = sphi 0, %s318
      %s336 = sphi 0, %s336
      %s338 = sphi 0, %s336
      %s339 = sphi 0, %s338
      %s353 = sphi 0, %s339
      %s357 = sphi 0, %s357
      %s359 = sphi 0, %s357
      %s360 = sphi 0, %s359
      %s374 = sphi 0, %s360
      %s378 = sphi 0, %s378
      %s380 = sphi 0, %s378
      %s381 = sphi 0, %s380
      %s395 = sphi 0, %s381
      %s399 = sphi 0, %s399
      %s401 = sphi 0, %s399
      %s402 = sphi 0, %s401
      %s416 = sphi 0, %s402
      %s420 = sphi 0, %s420
      %s422 = sphi 0, %s420
      %s423 = sphi 0, %s422
      %s437 = sphi 0, %s423
      %s441 = sphi 0, %s441
      %s443 = sphi 0, %s441
      %s444 = sphi 0, %s443
      %s458 = sphi 0, %s444
      %s464 = sphi 0, %s466
      %s467 = sphi 0, %s464
      %s468 = sphi 0, %s467
      %s484 = sphi 0, %s468
    $region4: #{tpu_custom_call.1} parent=1 // loop_header_branch
      %32 = sbr.rel (%p30) target = $region8
    $region5: #{tpu_custom_call.1} parent=1 // loop_body
      %s34 = ssub.s32 %s29, 1
      %s35 = ssub.s32 %s29, 2
      %s36 = sadd.s32 %s29, 1
      %s37 = ssub.s32 %s29, %s36
      %p38 = scmp.eq.s32.totalorder %s37, 0
      %s40 = sadd.s32 %s39, 1
      %s41 = scalar_select %p38, %s39, %s40
      %p44 = pneg %p38
      %p45 = scmp.eq.s32.totalorder %s29, 1
      %p46 = por %p44, %p45
      %p47 = scmp.ne.s32.totalorder %s39, %s42
      %p48 = scmp.eq.s32.totalorder %s29, 0
      %p49 = por %p47, %p48
      %p50 = scmp.ne.s32.totalorder %s39, %s42
      %p51 = scmp.eq.s32.totalorder %s34, 1
      %p52 = por %p50, %p51
      %p53 = scmp.ne.s32.totalorder %s42, %s43
      %p54 = scmp.eq.s32.totalorder %s34, 0
      %p55 = por %p53, %p54
      %p56 = scmp.ne.s32.totalorder %s42, %s43
      %p57 = scmp.eq.s32.totalorder %s35, 1
      %p58 = por %p56, %p57
      %p60 = scmp.ne.s32.totalorder %s43, %s59
      %p61 = scmp.eq.s32.totalorder %s35, 0
      %p62 = por %p60, %p61
      %s64 = sadd.s32 %s63, 1
      %p67 = scmp.eq.s32.totalorder %s29, 1
      %p68 = scmp.ne.s32.totalorder %s63, %s65
      %p69 = scmp.eq.s32.totalorder %s29, 0
      %p70 = por %p68, %p69
      %p71 = scmp.ne.s32.totalorder %s63, %s65
      %p72 = scmp.eq.s32.totalorder %s34, 1
      %p73 = por %p71, %p72
      %p74 = scmp.ne.s32.totalorder %s65, %s66
      %p75 = scmp.eq.s32.totalorder %s34, 0
      %p76 = por %p74, %p75
      %p77 = scmp.ne.s32.totalorder %s65, %s66
      %p78 = scmp.eq.s32.totalorder %s35, 1
      %p79 = por %p77, %p78
      %p81 = scmp.ne.s32.totalorder %s66, %s80
      %p82 = scmp.eq.s32.totalorder %s35, 0
      %p83 = por %p81, %p82
      %s85 = sadd.s32 %s84, 1
      %p88 = scmp.eq.s32.totalorder %s29, 1
      %p89 = scmp.ne.s32.totalorder %s84, %s86
      %p90 = scmp.eq.s32.totalorder %s29, 0
      %p91 = por %p89, %p90
      %p92 = scmp.ne.s32.totalorder %s84, %s86
      %p93 = scmp.eq.s32.totalorder %s34, 1
      %p94 = por %p92, %p93
      %p95 = scmp.ne.s32.totalorder %s86, %s87
      %p96 = scmp.eq.s32.totalorder %s34, 0
      %p97 = por %p95, %p96
      %p98 = scmp.ne.s32.totalorder %s86, %s87
      %p99 = scmp.eq.s32.totalorder %s35, 1
      %p100 = por %p98, %p99
      %p102 = scmp.ne.s32.totalorder %s87, %s101
      %p103 = scmp.eq.s32.totalorder %s35, 0
      %p104 = por %p102, %p103
      %s106 = sadd.s32 %s105, 1
      %p109 = scmp.eq.s32.totalorder %s29, 1
      %p110 = scmp.ne.s32.totalorder %s105, %s107
      %p111 = scmp.eq.s32.totalorder %s29, 0
      %p112 = por %p110, %p111
      %p113 = scmp.ne.s32.totalorder %s105, %s107
      %p114 = scmp.eq.s32.totalorder %s34, 1
      %p115 = por %p113, %p114
      %p116 = scmp.ne.s32.totalorder %s107, %s108
      %p117 = scmp.eq.s32.totalorder %s34, 0
      %p118 = por %p116, %p117
      %p119 = scmp.ne.s32.totalorder %s107, %s108
      %p120 = scmp.eq.s32.totalorder %s35, 1
      %p121 = por %p119, %p120
      %p123 = scmp.ne.s32.totalorder %s108, %s122
      %p124 = scmp.eq.s32.totalorder %s35, 0
      %p125 = por %p123, %p124
      %s127 = sadd.s32 %s126, 1
      %p130 = scmp.eq.s32.totalorder %s29, 1
      %p131 = scmp.ne.s32.totalorder %s126, %s128
      %p132 = scmp.eq.s32.totalorder %s29, 0
      %p133 = por %p131, %p132
      %p134 = scmp.ne.s32.totalorder %s126, %s128
      %p135 = scmp.eq.s32.totalorder %s34, 1
      %p136 = por %p134, %p135
      %p137 = scmp.ne.s32.totalorder %s128, %s129
      %p138 = scmp.eq.s32.totalorder %s34, 0
      %p139 = por %p137, %p138
      %p140 = scmp.ne.s32.totalorder %s128, %s129
      %p141 = scmp.eq.s32.totalorder %s35, 1
      %p142 = por %p140, %p141
      %p144 = scmp.ne.s32.totalorder %s129, %s143
      %p145 = scmp.eq.s32.totalorder %s35, 0
      %p146 = por %p144, %p145
      %s148 = sadd.s32 %s147, 1
      %p151 = scmp.eq.s32.totalorder %s29, 1
      %p152 = scmp.ne.s32.totalorder %s147, %s149
      %p153 = scmp.eq.s32.totalorder %s29, 0
      %p154 = por %p152, %p153
      %p155 = scmp.ne.s32.totalorder %s147, %s149
      %p156 = scmp.eq.s32.totalorder %s34, 1
      %p157 = por %p155, %p156
      %p158 = scmp.ne.s32.totalorder %s149, %s150
      %p159 = scmp.eq.s32.totalorder %s34, 0
      %p160 = por %p158, %p159
      %p161 = scmp.ne.s32.totalorder %s149, %s150
      %p162 = scmp.eq.s32.totalorder %s35, 1
      %p163 = por %p161, %p162
      %p165 = scmp.ne.s32.totalorder %s150, %s164
      %p166 = scmp.eq.s32.totalorder %s35, 0
      %p167 = por %p165, %p166
      %s169 = sadd.s32 %s168, 1
      %p172 = scmp.eq.s32.totalorder %s29, 1
      %p173 = scmp.ne.s32.totalorder %s168, %s170
      %p174 = scmp.eq.s32.totalorder %s29, 0
      %p175 = por %p173, %p174
      %p176 = scmp.ne.s32.totalorder %s168, %s170
      %p177 = scmp.eq.s32.totalorder %s34, 1
      %p178 = por %p176, %p177
      %p179 = scmp.ne.s32.totalorder %s170, %s171
      %p180 = scmp.eq.s32.totalorder %s34, 0
      %p181 = por %p179, %p180
      %p182 = scmp.ne.s32.totalorder %s170, %s171
      %p183 = scmp.eq.s32.totalorder %s35, 1
      %p184 = por %p182, %p183
      %p186 = scmp.ne.s32.totalorder %s171, %s185
      %p187 = scmp.eq.s32.totalorder %s35, 0
      %p188 = por %p186, %p187
      %s190 = sadd.s32 %s189, 1
      %p193 = scmp.eq.s32.totalorder %s29, 1
      %p194 = scmp.ne.s32.totalorder %s189, %s191
      %p195 = scmp.eq.s32.totalorder %s29, 0
      %p196 = por %p194, %p195
      %p197 = scmp.ne.s32.totalorder %s189, %s191
      %p198 = scmp.eq.s32.totalorder %s34, 1
      %p199 = por %p197, %p198
      %p200 = scmp.ne.s32.totalorder %s191, %s192
      %p201 = scmp.eq.s32.totalorder %s34, 0
      %p202 = por %p200, %p201
      %p203 = scmp.ne.s32.totalorder %s191, %s192
      %p204 = scmp.eq.s32.totalorder %s35, 1
      %p205 = por %p203, %p204
      %p207 = scmp.ne.s32.totalorder %s192, %s206
      %p208 = scmp.eq.s32.totalorder %s35, 0
      %p209 = por %p207, %p208
      %s211 = sadd.s32 %s210, 1
      %p214 = scmp.eq.s32.totalorder %s29, 1
      %p215 = scmp.ne.s32.totalorder %s210, %s212
      %p216 = scmp.eq.s32.totalorder %s29, 0
      %p217 = por %p215, %p216
      %p218 = scmp.ne.s32.totalorder %s210, %s212
      %p219 = scmp.eq.s32.totalorder %s34, 1
      %p220 = por %p218, %p219
      %p221 = scmp.ne.s32.totalorder %s212, %s213
      %p222 = scmp.eq.s32.totalorder %s34, 0
      %p223 = por %p221, %p222
      %p224 = scmp.ne.s32.totalorder %s212, %s213
      %p225 = scmp.eq.s32.totalorder %s35, 1
      %p226 = por %p224, %p225
      %p228 = scmp.ne.s32.totalorder %s213, %s227
      %p229 = scmp.eq.s32.totalorder %s35, 0
      %p230 = por %p228, %p229
      %s232 = sadd.s32 %s231, 1
      %p235 = scmp.eq.s32.totalorder %s29, 1
      %p236 = scmp.ne.s32.totalorder %s231, %s233
      %p237 = scmp.eq.s32.totalorder %s29, 0
      %p238 = por %p236, %p237
      %p239 = scmp.ne.s32.totalorder %s231, %s233
      %p240 = scmp.eq.s32.totalorder %s34, 1
      %p241 = por %p239, %p240
      %p242 = scmp.ne.s32.totalorder %s233, %s234
      %p243 = scmp.eq.s32.totalorder %s34, 0
      %p244 = por %p242, %p243
      %p245 = scmp.ne.s32.totalorder %s233, %s234
      %p246 = scmp.eq.s32.totalorder %s35, 1
      %p247 = por %p245, %p246
      %p249 = scmp.ne.s32.totalorder %s234, %s248
      %p250 = scmp.eq.s32.totalorder %s35, 0
      %p251 = por %p249, %p250
      %s253 = sadd.s32 %s252, 1
      %p256 = scmp.eq.s32.totalorder %s29, 1
      %p257 = scmp.ne.s32.totalorder %s252, %s254
      %p258 = scmp.eq.s32.totalorder %s29, 0
      %p259 = por %p257, %p258
      %p260 = scmp.ne.s32.totalorder %s252, %s254
      %p261 = scmp.eq.s32.totalorder %s34, 1
      %p262 = por %p260, %p261
      %p263 = scmp.ne.s32.totalorder %s254, %s255
      %p264 = scmp.eq.s32.totalorder %s34, 0
      %p265 = por %p263, %p264
      %p266 = scmp.ne.s32.totalorder %s254, %s255
      %p267 = scmp.eq.s32.totalorder %s35, 1
      %p268 = por %p266, %p267
      %p270 = scmp.ne.s32.totalorder %s255, %s269
      %p271 = scmp.eq.s32.totalorder %s35, 0
      %p272 = por %p270, %p271
      %s274 = sadd.s32 %s273, 1
      %p277 = scmp.eq.s32.totalorder %s29, 1
      %p278 = scmp.ne.s32.totalorder %s273, %s275
      %p279 = scmp.eq.s32.totalorder %s29, 0
      %p280 = por %p278, %p279
      %p281 = scmp.ne.s32.totalorder %s273, %s275
      %p282 = scmp.eq.s32.totalorder %s34, 1
      %p283 = por %p281, %p282
      %p284 = scmp.ne.s32.totalorder %s275, %s276
      %p285 = scmp.eq.s32.totalorder %s34, 0
      %p286 = por %p284, %p285
      %p287 = scmp.ne.s32.totalorder %s275, %s276
      %p288 = scmp.eq.s32.totalorder %s35, 1
      %p289 = por %p287, %p288
      %p291 = scmp.ne.s32.totalorder %s276, %s290
      %p292 = scmp.eq.s32.totalorder %s35, 0
      %p293 = por %p291, %p292
      %s295 = sadd.s32 %s294, 1
      %p298 = scmp.eq.s32.totalorder %s29, 1
      %p299 = scmp.ne.s32.totalorder %s294, %s296
      %p300 = scmp.eq.s32.totalorder %s29, 0
      %p301 = por %p299, %p300
      %p302 = scmp.ne.s32.totalorder %s294, %s296
      %p303 = scmp.eq.s32.totalorder %s34, 1
      %p304 = por %p302, %p303
      %p305 = scmp.ne.s32.totalorder %s296, %s297
      %p306 = scmp.eq.s32.totalorder %s34, 0
      %p307 = por %p305, %p306
      %p308 = scmp.ne.s32.totalorder %s296, %s297
      %p309 = scmp.eq.s32.totalorder %s35, 1
      %p310 = por %p308, %p309
      %p312 = scmp.ne.s32.totalorder %s297, %s311
      %p313 = scmp.eq.s32.totalorder %s35, 0
      %p314 = por %p312, %p313
      %s316 = sadd.s32 %s315, 1
      %p319 = scmp.eq.s32.totalorder %s29, 1
      %p320 = scmp.ne.s32.totalorder %s315, %s317
      %p321 = scmp.eq.s32.totalorder %s29, 0
      %p322 = por %p320, %p321
      %p323 = scmp.ne.s32.totalorder %s315, %s317
      %p324 = scmp.eq.s32.totalorder %s34, 1
      %p325 = por %p323, %p324
      %p326 = scmp.ne.s32.totalorder %s317, %s318
      %p327 = scmp.eq.s32.totalorder %s34, 0
      %p328 = por %p326, %p327
      %p329 = scmp.ne.s32.totalorder %s317, %s318
      %p330 = scmp.eq.s32.totalorder %s35, 1
      %p331 = por %p329, %p330
      %p333 = scmp.ne.s32.totalorder %s318, %s332
      %p334 = scmp.eq.s32.totalorder %s35, 0
      %p335 = por %p333, %p334
      %s337 = sadd.s32 %s336, 1
      %p340 = scmp.eq.s32.totalorder %s29, 1
      %p341 = scmp.ne.s32.totalorder %s336, %s338
      %p342 = scmp.eq.s32.totalorder %s29, 0
      %p343 = por %p341, %p342
      %p344 = scmp.ne.s32.totalorder %s336, %s338
      %p345 = scmp.eq.s32.totalorder %s34, 1
      %p346 = por %p344, %p345
      %p347 = scmp.ne.s32.totalorder %s338, %s339
      %p348 = scmp.eq.s32.totalorder %s34, 0
      %p349 = por %p347, %p348
      %p350 = scmp.ne.s32.totalorder %s338, %s339
      %p351 = scmp.eq.s32.totalorder %s35, 1
      %p352 = por %p350, %p351
      %p354 = scmp.ne.s32.totalorder %s339, %s353
      %p355 = scmp.eq.s32.totalorder %s35, 0
      %p356 = por %p354, %p355
      %s358 = sadd.s32 %s357, 1
      %p361 = scmp.eq.s32.totalorder %s29, 1
      %p362 = scmp.ne.s32.totalorder %s357, %s359
      %p363 = scmp.eq.s32.totalorder %s29, 0
      %p364 = por %p362, %p363
      %p365 = scmp.ne.s32.totalorder %s357, %s359
      %p366 = scmp.eq.s32.totalorder %s34, 1
      %p367 = por %p365, %p366
      %p368 = scmp.ne.s32.totalorder %s359, %s360
      %p369 = scmp.eq.s32.totalorder %s34, 0
      %p370 = por %p368, %p369
      %p371 = scmp.ne.s32.totalorder %s359, %s360
      %p372 = scmp.eq.s32.totalorder %s35, 1
      %p373 = por %p371, %p372
      %p375 = scmp.ne.s32.totalorder %s360, %s374
      %p376 = scmp.eq.s32.totalorder %s35, 0
      %p377 = por %p375, %p376
      %s379 = sadd.s32 %s378, 1
      %p382 = scmp.eq.s32.totalorder %s29, 1
      %p383 = scmp.ne.s32.totalorder %s378, %s380
      %p384 = scmp.eq.s32.totalorder %s29, 0
      %p385 = por %p383, %p384
      %p386 = scmp.ne.s32.totalorder %s378, %s380
      %p387 = scmp.eq.s32.totalorder %s34, 1
      %p388 = por %p386, %p387
      %p389 = scmp.ne.s32.totalorder %s380, %s381
      %p390 = scmp.eq.s32.totalorder %s34, 0
      %p391 = por %p389, %p390
      %p392 = scmp.ne.s32.totalorder %s380, %s381
      %p393 = scmp.eq.s32.totalorder %s35, 1
      %p394 = por %p392, %p393
      %p396 = scmp.ne.s32.totalorder %s381, %s395
      %p397 = scmp.eq.s32.totalorder %s35, 0
      %p398 = por %p396, %p397
      %s400 = sadd.s32 %s399, 1
      %p403 = scmp.eq.s32.totalorder %s29, 1
      %p404 = scmp.ne.s32.totalorder %s399, %s401
      %p405 = scmp.eq.s32.totalorder %s29, 0
      %p406 = por %p404, %p405
      %p407 = scmp.ne.s32.totalorder %s399, %s401
      %p408 = scmp.eq.s32.totalorder %s34, 1
      %p409 = por %p407, %p408
      %p410 = scmp.ne.s32.totalorder %s401, %s402
      %p411 = scmp.eq.s32.totalorder %s34, 0
      %p412 = por %p410, %p411
      %p413 = scmp.ne.s32.totalorder %s401, %s402
      %p414 = scmp.eq.s32.totalorder %s35, 1
      %p415 = por %p413, %p414
      %p417 = scmp.ne.s32.totalorder %s402, %s416
      %p418 = scmp.eq.s32.totalorder %s35, 0
      %p419 = por %p417, %p418
      %s421 = sadd.s32 %s420, 1
      %p424 = scmp.eq.s32.totalorder %s29, 1
      %p425 = scmp.ne.s32.totalorder %s420, %s422
      %p426 = scmp.eq.s32.totalorder %s29, 0
      %p427 = por %p425, %p426
      %p428 = scmp.ne.s32.totalorder %s420, %s422
      %p429 = scmp.eq.s32.totalorder %s34, 1
      %p430 = por %p428, %p429
      %p431 = scmp.ne.s32.totalorder %s422, %s423
      %p432 = scmp.eq.s32.totalorder %s34, 0
      %p433 = por %p431, %p432
      %p434 = scmp.ne.s32.totalorder %s422, %s423
      %p435 = scmp.eq.s32.totalorder %s35, 1
      %p436 = por %p434, %p435
      %p438 = scmp.ne.s32.totalorder %s423, %s437
      %p439 = scmp.eq.s32.totalorder %s35, 0
      %p440 = por %p438, %p439
      %s442 = sadd.s32 %s441, 1
      %p445 = scmp.eq.s32.totalorder %s29, 1
      %p446 = scmp.ne.s32.totalorder %s441, %s443
      %p447 = scmp.eq.s32.totalorder %s29, 0
      %p448 = por %p446, %p447
      %p449 = scmp.ne.s32.totalorder %s441, %s443
      %p450 = scmp.eq.s32.totalorder %s34, 1
      %p451 = por %p449, %p450
      %p452 = scmp.ne.s32.totalorder %s443, %s444
      %p453 = scmp.eq.s32.totalorder %s34, 0
      %p454 = por %p452, %p453
      %p455 = scmp.ne.s32.totalorder %s443, %s444
      %p456 = scmp.eq.s32.totalorder %s35, 1
      %p457 = por %p455, %p456
      %p459 = scmp.ne.s32.totalorder %s444, %s458
      %p460 = scmp.eq.s32.totalorder %s35, 0
      %p461 = por %p459, %p460
      %s462 = ssub.s32 %s29, %s36
      %p463 = scmp.eq.s32.totalorder %s462, 0
      %s465 = sadd.s32 %s464, 1
      %s466 = scalar_select %p463, %s464, %s465
      %p469 = pneg %p463
      %p470 = scmp.eq.s32.totalorder %s29, 1
      %p471 = por %p469, %p470
      %p472 = scmp.ne.s32.totalorder %s464, %s467
      %p473 = scmp.eq.s32.totalorder %s29, 0
      %p474 = por %p472, %p473
      %p475 = scmp.ne.s32.totalorder %s464, %s467
      %p476 = scmp.eq.s32.totalorder %s34, 1
      %p477 = por %p475, %p476
      %p478 = scmp.ne.s32.totalorder %s467, %s468
      %p479 = scmp.eq.s32.totalorder %s34, 0
      %p480 = por %p478, %p479
      %p481 = scmp.ne.s32.totalorder %s467, %s468
      %p482 = scmp.eq.s32.totalorder %s35, 1
      %p483 = por %p481, %p482
      %p485 = scmp.ne.s32.totalorder %s468, %s484
      %p486 = scmp.eq.s32.totalorder %s35, 0
      %p487 = por %p485, %p486
      %p488 = scmp.le.s32.totalorder 1, %s29
      %p489 = scmp.lt.s32.totalorder %s29, 3
      %p490 = pnand %p488, %p489
      %p491 = pneg %p490
      // Predicated region
      $region9: #{tpu_custom_call.1} parent=5 // pred_check
        _
      $region10: #{tpu_custom_call.1} parent=5 // pred_check_branch
        %493 = sbr.rel (%p490) target = $region12
      $region11: #{tpu_custom_call.1} parent=5 // pred_region
        %s494 = ssub.s32 %s29, 1
        // Predicated region
        $region13: #{tpu_custom_call.1} parent=11 // pred_check
          %p495 = pneg %p76
        $region14: #{tpu_custom_call.1} parent=11 // pred_check_branch
          %497 = sbr.rel (%p495) target = $region16
        $region15: #{tpu_custom_call.1} parent=11 // pred_region
          _
        $region16: #{tpu_custom_call.1} parent=11 // pred_fallthru
          _
        // Predicated region
        $region17: #{tpu_custom_call.1} parent=11 // pred_check
          %p498 = pneg %p97
        $region18: #{tpu_custom_call.1} parent=11 // pred_check_branch
          %500 = sbr.rel (%p498) target = $region20
        $region19: #{tpu_custom_call.1} parent=11 // pred_region
          _
        $region20: #{tpu_custom_call.1} parent=11 // pred_fallthru
          _
        // Predicated region
        $region21: #{tpu_custom_call.1} parent=11 // pred_check
          %p501 = pneg %p118
        $region22: #{tpu_custom_call.1} parent=11 // pred_check_branch
          %503 = sbr.rel (%p501) target = $region24
        $region23: #{tpu_custom_call.1} parent=11 // pred_region
          _
        $region24: #{tpu_custom_call.1} parent=11 // pred_fallthru
          _
        // Predicated region
        $region25: #{tpu_custom_call.1} parent=11 // pred_check
          %p504 = pneg %p139
        $region26: #{tpu_custom_call.1} parent=11 // pred_check_branch
          %506 = sbr.rel (%p504) target = $region28
        $region27: #{tpu_custom_call.1} parent=11 // pred_region
          _
        $region28: #{tpu_custom_call.1} parent=11 // pred_fallthru
          _
        // Predicated region
        $region29: #{tpu_custom_call.1} parent=11 // pred_check
          %p507 = pneg %p160
        $region30: #{tpu_custom_call.1} parent=11 // pred_check_branch
          %509 = sbr.rel (%p507) target = $region32
        $region31: #{tpu_custom_call.1} parent=11 // pred_region
          _
        $region32: #{tpu_custom_call.1} parent=11 // pred_fallthru
          _
        // Predicated region
        $region33: #{tpu_custom_call.1} parent=11 // pred_check
          %p510 = pneg %p181
        $region34: #{tpu_custom_call.1} parent=11 // pred_check_branch
          %512 = sbr.rel (%p510) target = $region36
        $region35: #{tpu_custom_call.1} parent=11 // pred_region
          _
        $region36: #{tpu_custom_call.1} parent=11 // pred_fallthru
          _
        // Predicated region
        $region37: #{tpu_custom_call.1} parent=11 // pred_check
          %p513 = pneg %p202
        $region38: #{tpu_custom_call.1} parent=11 // pred_check_branch
          %515 = sbr.rel (%p513) target = $region40
        $region39: #{tpu_custom_call.1} parent=11 // pred_region
          _
        $region40: #{tpu_custom_call.1} parent=11 // pred_fallthru
          _
        // Predicated region
        $region41: #{tpu_custom_call.1} parent=11 // pred_check
          %p516 = pneg %p223
        $region42: #{tpu_custom_call.1} parent=11 // pred_check_branch
          %518 = sbr.rel (%p516) target = $region44
        $region43: #{tpu_custom_call.1} parent=11 // pred_region
          _
        $region44: #{tpu_custom_call.1} parent=11 // pred_fallthru
          _
        // Predicated region
        $region45: #{tpu_custom_call.1} parent=11 // pred_check
          %p519 = pneg %p244
        $region46: #{tpu_custom_call.1} parent=11 // pred_check_branch
          %521 = sbr.rel (%p519) target = $region48
        $region47: #{tpu_custom_call.1} parent=11 // pred_region
          _
        $region48: #{tpu_custom_call.1} parent=11 // pred_fallthru
          _
        // Predicated region
        $region49: #{tpu_custom_call.1} parent=11 // pred_check
          %p522 = pneg %p265
        $region50: #{tpu_custom_call.1} parent=11 // pred_check_branch
          %524 = sbr.rel (%p522) target = $region52
        $region51: #{tpu_custom_call.1} parent=11 // pred_region
          _
        $region52: #{tpu_custom_call.1} parent=11 // pred_fallthru
          _
        // Predicated region
        $region53: #{tpu_custom_call.1} parent=11 // pred_check
          %p525 = pneg %p286
        $region54: #{tpu_custom_call.1} parent=11 // pred_check_branch
          %527 = sbr.rel (%p525) target = $region56
        $region55: #{tpu_custom_call.1} parent=11 // pred_region
          _
        $region56: #{tpu_custom_call.1} parent=11 // pred_fallthru
          _
        // Predicated region
        $region57: #{tpu_custom_call.1} parent=11 // pred_check
          %p528 = pneg %p307
        $region58: #{tpu_custom_call.1} parent=11 // pred_check_branch
          %530 = sbr.rel (%p528) target = $region60
        $region59: #{tpu_custom_call.1} parent=11 // pred_region
          _
        $region60: #{tpu_custom_call.1} parent=11 // pred_fallthru
          _
        // Predicated region
        $region61: #{tpu_custom_call.1} parent=11 // pred_check
          %p531 = pneg %p328
        $region62: #{tpu_custom_call.1} parent=11 // pred_check_branch
          %533 = sbr.rel (%p531) target = $region64
        $region63: #{tpu_custom_call.1} parent=11 // pred_region
          _
        $region64: #{tpu_custom_call.1} parent=11 // pred_fallthru
          _
        // Predicated region
        $region65: #{tpu_custom_call.1} parent=11 // pred_check
          %p534 = pneg %p349
        $region66: #{tpu_custom_call.1} parent=11 // pred_check_branch
          %536 = sbr.rel (%p534) target = $region68
        $region67: #{tpu_custom_call.1} parent=11 // pred_region
          _
        $region68: #{tpu_custom_call.1} parent=11 // pred_fallthru
          _
        // Predicated region
        $region69: #{tpu_custom_call.1} parent=11 // pred_check
          %p537 = pneg %p370
        $region70: #{tpu_custom_call.1} parent=11 // pred_check_branch
          %539 = sbr.rel (%p537) target = $region72
        $region71: #{tpu_custom_call.1} parent=11 // pred_region
          _
        $region72: #{tpu_custom_call.1} parent=11 // pred_fallthru
          _
        // Predicated region
        $region73: #{tpu_custom_call.1} parent=11 // pred_check
          %p540 = pneg %p391
        $region74: #{tpu_custom_call.1} parent=11 // pred_check_branch
          %542 = sbr.rel (%p540) target = $region76
        $region75: #{tpu_custom_call.1} parent=11 // pred_region
          _
        $region76: #{tpu_custom_call.1} parent=11 // pred_fallthru
          _
        // Predicated region
        $region77: #{tpu_custom_call.1} parent=11 // pred_check
          %p543 = pneg %p412
        $region78: #{tpu_custom_call.1} parent=11 // pred_check_branch
          %545 = sbr.rel (%p543) target = $region80
        $region79: #{tpu_custom_call.1} parent=11 // pred_region
          _
        $region80: #{tpu_custom_call.1} parent=11 // pred_fallthru
          _
        // Predicated region
        $region81: #{tpu_custom_call.1} parent=11 // pred_check
          %p546 = pneg %p433
        $region82: #{tpu_custom_call.1} parent=11 // pred_check_branch
          %548 = sbr.rel (%p546) target = $region84
        $region83: #{tpu_custom_call.1} parent=11 // pred_region
          _
        $region84: #{tpu_custom_call.1} parent=11 // pred_fallthru
          _
        // Predicated region
        $region85: #{tpu_custom_call.1} parent=11 // pred_check
          %p549 = pneg %p454
        $region86: #{tpu_custom_call.1} parent=11 // pred_check_branch
          %551 = sbr.rel (%p549) target = $region88
        $region87: #{tpu_custom_call.1} parent=11 // pred_region
          _
        $region88: #{tpu_custom_call.1} parent=11 // pred_fallthru
          _
      $region12: #{tpu_custom_call.1} parent=5 // pred_fallthru
        _
      %p552 = scmp.lt.s32.totalorder %s29, 2
      // Predicated region
      $region89: #{tpu_custom_call.1} parent=5 // pred_check
        %p553 = pneg %p552
      $region90: #{tpu_custom_call.1} parent=5 // pred_check_branch
        %555 = sbr.rel (%p553) target = $region92
      $region91: #{tpu_custom_call.1} parent=5 // pred_region
        // Predicated region
        $region93: #{tpu_custom_call.1} parent=91 // pred_check
          %p556 = pneg %p49
        $region94: #{tpu_custom_call.1} parent=91 // pred_check_branch
          %558 = sbr.rel (%p556) target = $region96
        $region95: #{tpu_custom_call.1} parent=91 // pred_region
          %p559 = scmp.lt.s32.totalorder %s29, 1
          %s560 = scalar_select %p559, %s29, 1
          %s561 = smul.addr %s560, 8
          %s562 = scalar_lea.vmem %s0, %s561
        $region96: #{tpu_custom_call.1} parent=91 // pred_fallthru
          _
      $region92: #{tpu_custom_call.1} parent=5 // pred_fallthru
        _
      %p563 = scmp.le.s32.totalorder 1, %s29
      %p564 = scmp.lt.s32.totalorder %s29, 3
      %p565 = pnand %p563, %p564
      %p566 = pneg %p565
      // Predicated region
      $region97: #{tpu_custom_call.1} parent=5 // pred_check
        _
      $region98: #{tpu_custom_call.1} parent=5 // pred_check_branch
        %568 = sbr.rel (%p565) target = $region100
      $region99: #{tpu_custom_call.1} parent=5 // pred_region
        %s569 = ssub.s32 %s29, 1
        %p570 = scmp.lt.s32.totalorder %s34, 1
        %s571 = scalar_select %p570, %s34, 1
        %s572 = smul.addr %s571, 8
        %s573 = scalar_lea.vmem %s0, %s572
        %p574 = pneg %p55
        %p575 = pneg %p52
        %p576 = pneg %p76
        %p577 = pneg %p73
        %p578 = pneg %p97
        %p579 = pneg %p94
        %p580 = pneg %p118
        %p581 = pneg %p115
        %p582 = pneg %p139
        %p583 = pneg %p136
        %p584 = pneg %p160
        %p585 = pneg %p157
        %p586 = pneg %p181
        %p587 = pneg %p178
        %p588 = pneg %p202
        %p589 = pneg %p199
        %p590 = pneg %p223
        %p591 = pneg %p220
        %p592 = pneg %p244
        %p593 = pneg %p241
        %p594 = pneg %p265
        %p595 = pneg %p262
        %p596 = pneg %p286
        %p597 = pneg %p283
        %p598 = pneg %p307
        %p599 = pneg %p304
        %p600 = pneg %p328
        %p601 = pneg %p325
        %p602 = pneg %p349
        %p603 = pneg %p346
        %p604 = pneg %p370
        %p605 = pneg %p367
        %p606 = pneg %p391
        %p607 = pneg %p388
        %p608 = pneg %p412
        %p609 = pneg %p409
        %p610 = pneg %p433
        %p611 = pneg %p430
        %p612 = pneg %p454
        %p613 = pneg %p451
        %p614 = pneg %p480
        %p615 = pneg %p477
        %s616 = sand.u32 %s467, 1
        %s617 = scalar_lea.sflag [#allocation9], %s616
        %s618 = sand.u32 %s467, 1
        %s619 = smul.addr %s618, 8
        %s620 = scalar_lea.vmem [#allocation8], %s619
        %p621 = scmp.lt.s32.totalorder %s34, 1
        %s622 = scalar_select %p621, %s34, 1
        %s623 = smul.addr %s622, 8
        %s624 = scalar_lea.vmem %s0, %s623
        %v625 = vld [vmem:[%s624] sm:$0xff]
        %v626 = vld [vmem:[%s1] sm:$0xff]
        %v627 = vld [vmem:[%s1 + $0x8] sm:$0xff]
        %v628 = vld [vmem:[%s1 + $0x10] sm:$0xff]
        %v629 = vld [vmem:[%s1 + $0x18] sm:$0xff]
        %v630 = vld [vmem:[%s2] sm:$0x1]
        %v632 = vperm.slane %v630, 0
        %vm634 = vcmask 261120
        %v636 = vsel %vm634, %v625, 0
        %638 = vmatpush.msra.mxu0 0.0
        %639 = vmatpush.msra.mxu0 0.0
        %640 = vmatpush.msra.mxu0 0.0
        %641 = vmatpush.msra.mxu0 0.0
        %642 = vmatpush.msra.mxu0 0.0
        %643 = vmatpush.msra.mxu0 0.0
        %644 = vmatpush.msra.mxu0 0.0
        %645 = vmatpush.msra.mxu0 0.0
        %646 = vmatpush.msra.mxu0 0.0
        %647 = vmatpush.msra.mxu0 0.0
        %648 = vmatpush.msra.mxu0 0.0
        %649 = vmatpush.msra.mxu0 0.0
        %650 = vmatpush.msra.mxu0 %v629
        %651 = vmatpush.msra.mxu0 %v628
        %652 = vmatpush.msra.mxu0 %v627
        %653 = vmatpush.msra.mxu0 %v626
        %654 = vmatmul.f32.gmra.mxu0 %v636
        %v655 = vpop.f32.mrf.mxu0
        %v656 = vadd.f32 %v632, %v655
        %657 = vdwg.mxu0
        %v658 = vmul.f32 %v656, 0.35355338
        %v659 = vld [vmem:[%s3] sm:$0xff]
        %v660 = vld [vmem:[%s3 + $0x8] sm:$0xff]
        %v661 = vld [vmem:[%s3 + $0x10] sm:$0xff]
        %v662 = vld [vmem:[%s3 + $0x18] sm:$0xff]
        %v663 = vld [vmem:[%s4] sm:$0x1]
        %v665 = vperm.slane %v663, 0
        %667 = vmatpush.msra.mxu0 0.0
        %668 = vmatpush.msra.mxu0 0.0
        %669 = vmatpush.msra.mxu0 0.0
        %670 = vmatpush.msra.mxu0 0.0
        %671 = vmatpush.msra.mxu0 0.0
        %672 = vmatpush.msra.mxu0 0.0
        %673 = vmatpush.msra.mxu0 0.0
        %674 = vmatpush.msra.mxu0 0.0
        %675 = vmatpush.msra.mxu0 0.0
        %676 = vmatpush.msra.mxu0 0.0
        %677 = vmatpush.msra.mxu0 0.0
        %678 = vmatpush.msra.mxu0 0.0
        %679 = vmatpush.msra.mxu0 %v662
        %680 = vmatpush.msra.mxu0 %v661
        %681 = vmatpush.msra.mxu0 %v660
        %682 = vmatpush.msra.mxu0 %v659
        %683 = vmatmul.f32.gmra.mxu0 %v636
        %v684 = vpop.f32.mrf.mxu0
        %v685 = vadd.f32 %v665, %v684
        %686 = vdwg.mxu0
        %v687 = vld [vmem:[%s5] sm:$0xff]
        %v688 = vld [vmem:[%s5 + $0x8] sm:$0xff]
        %v689 = vld [vmem:[%s5 + $0x10] sm:$0xff]
        %v690 = vld [vmem:[%s5 + $0x18] sm:$0xff]
        %v691 = vld [vmem:[%s6] sm:$0x1]
        %v693 = vperm.slane %v691, 0
        %695 = vmatpush.msra.mxu0 0.0
        %696 = vmatpush.msra.mxu0 0.0
        %697 = vmatpush.msra.mxu0 0.0
        %698 = vmatpush.msra.mxu0 0.0
        %699 = vmatpush.msra.mxu0 0.0
        %700 = vmatpush.msra.mxu0 0.0
        %701 = vmatpush.msra.mxu0 0.0
        %702 = vmatpush.msra.mxu0 0.0
        %703 = vmatpush.msra.mxu0 0.0
        %704 = vmatpush.msra.mxu0 0.0
        %705 = vmatpush.msra.mxu0 0.0
        %706 = vmatpush.msra.mxu0 0.0
        %707 = vmatpush.msra.mxu0 %v690
        %708 = vmatpush.msra.mxu0 %v689
        %709 = vmatpush.msra.mxu0 %v688
        %710 = vmatpush.msra.mxu0 %v687
        %711 = vmatmul.f32.gmra.mxu0 %v636
        %v712 = vpop.f32.mrf.mxu0
        %v713 = vadd.f32 %v693, %v712
        %714 = vdwg.mxu0
        %716 = vrot.lane.b32.xlu0 %v658, 120
        %v717 = vpop.permute.xlu0 %716
        %718 = vrot.lane.b32.xlu0 %v658, 112
        %v719 = vpop.permute.xlu0 %718
        %720 = vrot.lane.b32.xlu0 %v658, 104
        %v721 = vpop.permute.xlu0 %720
        %vm722 = vcmask 64512
        %v723 = vsel %vm722, %v658, 0
        %v725 = vsel %vm722, %v717, 0
        %v727 = vsel %vm722, %v719, 0
        %v729 = vsel %vm722, %v721, 0
        %v732 = vsel %vm722, %v685, 0
        %734 = vmatpush.xpose.msra.mxu0 0.0
        %735 = vmatpush.xpose.msra.mxu0 0.0
        %736 = vmatpush.xpose.msra.mxu0 0.0
        %737 = vmatpush.xpose.msra.mxu0 0.0
        %738 = vmatpush.xpose.msra.mxu0 0.0
        %739 = vmatpush.xpose.msra.mxu0 0.0
        %740 = vmatpush.xpose.msra.mxu0 0.0
        %741 = vmatpush.xpose.msra.mxu0 0.0
        %742 = vmatpush.xpose.msra.mxu0 0.0
        %743 = vmatpush.xpose.msra.mxu0 0.0
        %744 = vmatpush.xpose.msra.mxu0 0.0
        %745 = vmatpush.xpose.msra.mxu0 0.0
        %746 = vmatpush.xpose.msra.mxu0 0.0
        %747 = vmatpush.xpose.msra.mxu0 0.0
        %748 = vmatpush.xpose.msra.mxu0 0.0
        %749 = vmatpush.xpose.msra.mxu0 %v732
        %750 = vmatmul.f32.gmra.mxu0 %v723
        %v751 = vpop.f32.mrf.mxu0
        %v752 = vadd.f32 0.0, %v751
        %753 = vmatmul.f32.gmra.mxu0 %v725
        %v754 = vpop.f32.mrf.mxu0
        %v755 = vadd.f32 0.0, %v754
        %756 = vmatmul.f32.gmra.mxu0 %v727
        %v757 = vpop.f32.mrf.mxu0
        %v758 = vadd.f32 0.0, %v757
        %759 = vmatmul.f32.gmra.mxu0 %v729
        %v760 = vpop.f32.mrf.mxu0
        %v761 = vadd.f32 0.0, %v760
        %762 = vdwg.mxu0
        %v763 = vlaneseq
        %v764 = vshrl.u32 %v763, 7
        %v765 = vlaneseq
        %v766 = vand.u32 %v765, 127
        %vm767 = vcmp.le.s32.totalorder %v766, %v764
        %v768 = vsel %vm767, %v752, -3.4028235e+38
        %v769 = vsel %vm767, %v755, -3.4028235e+38
        %v770 = vsel %vm767, %v758, -3.4028235e+38
        %v771 = vsel %vm767, %v761, -3.4028235e+38
        %v772 = vsel %vm722, %v768, -inf
        %773 = vmax.xlane.f32.xlu0 %v772
        %v774 = vpop.xlane.xlu0 %773
        %v775 = vsel %vm722, %v769, -inf
        %776 = vmax.xlane.f32.xlu0 %v775
        %v777 = vpop.xlane.xlu0 %776
        %v778 = vsel %vm722, %v770, -inf
        %779 = vmax.xlane.f32.xlu0 %v778
        %v780 = vpop.xlane.xlu0 %779
        %v781 = vsel %vm722, %v771, -inf
        %782 = vmax.xlane.f32.xlu0 %v781
        %v783 = vpop.xlane.xlu0 %782
        %v784 = vsub.f32 %v768, %v774
        %v785 = vsub.f32 %v769, %v777
        %v786 = vsub.f32 %v770, %v780
        %v787 = vsub.f32 %v771, %v783
        %v788 = vmul.f32 %v784, 1.442695
        %v789 = vpow.pop %v788
        %v790 = vmul.f32 %v785, 1.442695
        %v791 = vpow.pop %v790
        %v792 = vmul.f32 %v786, 1.442695
        %v793 = vpow.pop %v792
        %v794 = vmul.f32 %v787, 1.442695
        %v795 = vpow.pop %v794
        %v796 = vsel %vm722, %v789, 0.0
        %797 = vadd.xlane.f32.xlu0 %v796
        %v798 = vpop.xlane.xlu0 %797
        %v799 = vsel %vm722, %v791, 0.0
        %800 = vadd.xlane.f32.xlu0 %v799
        %v801 = vpop.xlane.xlu0 %800
        %v802 = vsel %vm722, %v793, 0.0
        %803 = vadd.xlane.f32.xlu0 %v802
        %v804 = vpop.xlane.xlu0 %803
        %v805 = vsel %vm722, %v795, 0.0
        %806 = vadd.xlane.f32.xlu0 %v805
        %v807 = vpop.xlane.xlu0 %806
        %v808 = vrcp.pop %v798
        %v809 = vmul.f32 %v798, %v808
        %v810 = vsub.f32 1.0, %v809
        %v811 = vmul.f32 %v808, %v810
        %v812 = vadd.f32 %v808, %v811
        %vm813 = vweird.f32 %v798
        %vm814 = vweird.f32 %v808
        %vm815 = vmor %vm813, %vm814
        %v816 = vsel %vm815, %v808, %v812
        %v817 = vand.u32 2147483647, %v798
        %vm818 = vcmp.eq.f32.partialorder %v817, 8.507059e+37
        %v819 = vand.u32 %v798, 2147483648
        %v820 = vor.u32 1.1754944e-38, %v819
        %v821 = vsel %vm818, %v820, %v816
        %v822 = vmul.f32 %v789, %v821
        %v823 = vrcp.pop %v801
        %v824 = vmul.f32 %v801, %v823
        %v825 = vsub.f32 1.0, %v824
        %v826 = vmul.f32 %v823, %v825
        %v827 = vadd.f32 %v823, %v826
        %vm828 = vweird.f32 %v801
        %vm829 = vweird.f32 %v823
        %vm830 = vmor %vm828, %vm829
        %v831 = vsel %vm830, %v823, %v827
        %v832 = vand.u32 2147483647, %v801
        %vm833 = vcmp.eq.f32.partialorder %v832, 8.507059e+37
        %v834 = vand.u32 %v801, 2147483648
        %v835 = vor.u32 1.1754944e-38, %v834
        %v836 = vsel %vm833, %v835, %v831
        %v837 = vmul.f32 %v791, %v836
        %v838 = vrcp.pop %v804
        %v839 = vmul.f32 %v804, %v838
        %v840 = vsub.f32 1.0, %v839
        %v841 = vmul.f32 %v838, %v840
        %v842 = vadd.f32 %v838, %v841
        %vm843 = vweird.f32 %v804
        %vm844 = vweird.f32 %v838
        %vm845 = vmor %vm843, %vm844
        %v846 = vsel %vm845, %v838, %v842
        %v847 = vand.u32 2147483647, %v804
        %vm848 = vcmp.eq.f32.partialorder %v847, 8.507059e+37
        %v849 = vand.u32 %v804, 2147483648
        %v850 = vor.u32 1.1754944e-38, %v849
        %v851 = vsel %vm848, %v850, %v846
        %v852 = vmul.f32 %v793, %v851
        %v853 = vrcp.pop %v807
        %v854 = vmul.f32 %v807, %v853
        %v855 = vsub.f32 1.0, %v854
        %v856 = vmul.f32 %v853, %v855
        %v857 = vadd.f32 %v853, %v856
        %vm858 = vweird.f32 %v807
        %vm859 = vweird.f32 %v853
        %vm860 = vmor %vm858, %vm859
        %v861 = vsel %vm860, %v853, %v857
        %v862 = vand.u32 2147483647, %v807
        %vm863 = vcmp.eq.f32.partialorder %v862, 8.507059e+37
        %v864 = vand.u32 %v807, 2147483648
        %v865 = vor.u32 1.1754944e-38, %v864
        %v866 = vsel %vm863, %v865, %v861
        %v867 = vmul.f32 %v795, %v866
        %v869 = vsel %vm722, %v822, 0
        %v872 = vsel %vm722, %v837, 0
        %v875 = vsel %vm722, %v852, 0
        %v878 = vsel %vm722, %v867, 0
        %880 = vmatpush.msra.mxu0 0.0
        %881 = vmatpush.msra.mxu0 0.0
        %882 = vmatpush.msra.mxu0 0.0
        %883 = vmatpush.msra.mxu0 0.0
        %884 = vmatpush.msra.mxu0 0.0
        %885 = vmatpush.msra.mxu0 0.0
        %886 = vmatpush.msra.mxu0 0.0
        %887 = vmatpush.msra.mxu0 0.0
        %888 = vmatpush.msra.mxu0 0.0
        %889 = vmatpush.msra.mxu0 0.0
        %890 = vmatpush.msra.mxu0 0.0
        %891 = vmatpush.msra.mxu0 0.0
        %892 = vmatpush.msra.mxu0 0.0
        %893 = vmatpush.msra.mxu0 0.0
        %894 = vmatpush.msra.mxu0 0.0
        %895 = vmatpush.msra.mxu0 %v713
        %896 = vmatmul.f32.gmra.mxu0 %v869
        %v897 = vpop.f32.mrf.mxu0
        %v898 = vadd.f32 0.0, %v897
        %899 = vmatmul.f32.gmra.mxu0 %v872
        %v900 = vpop.f32.mrf.mxu0
        %v901 = vadd.f32 0.0, %v900
        %902 = vmatmul.f32.gmra.mxu0 %v875
        %v903 = vpop.f32.mrf.mxu0
        %v904 = vadd.f32 0.0, %v903
        %905 = vmatmul.f32.gmra.mxu0 %v878
        %v906 = vpop.f32.mrf.mxu0
        %v907 = vadd.f32 0.0, %v906
        %908 = vdwg.mxu0
        %910 = vrot.lane.b32.xlu0 %v901, 8
        %v911 = vpop.permute.xlu0 %910
        %914 = vrot.lane.b32.xlu0 %v904, 16
        %v915 = vpop.permute.xlu0 %914
        %918 = vrot.lane.b32.xlu0 %v907, 24
        %v919 = vpop.permute.xlu0 %918
        %v921 = vsel %vm722, %v898, %v911
        %vm922 = vcmask 130048
        %v923 = vsel %vm922, %v921, %v915
        %vm924 = vcmask 195584
        %v925 = vsel %vm924, %v923, %v919
        %v926 = vld [vmem:[%s7] sm:$0xff]
        %v927 = vld [vmem:[%s7 + $0x8] sm:$0xff]
        %v928 = vld [vmem:[%s7 + $0x10] sm:$0xff]
        %v929 = vld [vmem:[%s7 + $0x18] sm:$0xff]
        %v930 = vld [vmem:[%s8] sm:$0x1]
        %v932 = vperm.slane %v930, 0
        %v935 = vsel %vm634, %v925, 0
        %937 = vmatpush.msra.mxu0 0.0
        %938 = vmatpush.msra.mxu0 0.0
        %939 = vmatpush.msra.mxu0 0.0
        %940 = vmatpush.msra.mxu0 0.0
        %941 = vmatpush.msra.mxu0 0.0
        %942 = vmatpush.msra.mxu0 0.0
        %943 = vmatpush.msra.mxu0 0.0
        %944 = vmatpush.msra.mxu0 0.0
        %945 = vmatpush.msra.mxu0 0.0
        %946 = vmatpush.msra.mxu0 0.0
        %947 = vmatpush.msra.mxu0 0.0
        %948 = vmatpush.msra.mxu0 0.0
        %949 = vmatpush.msra.mxu0 %v929
        %950 = vmatpush.msra.mxu0 %v928
        %951 = vmatpush.msra.mxu0 %v927
        %952 = vmatpush.msra.mxu0 %v926
        %953 = vmatmul.f32.gmra.mxu0 %v935
        %v954 = vpop.f32.mrf.mxu0
        %v955 = vadd.f32 %v932, %v954
        %956 = vdwg.mxu0
        %v957 = vadd.f32 %v955, %v625
        %v958 = vld [vmem:[%s9] sm:$0xff]
        %v959 = vld [vmem:[%s9 + $0x8] sm:$0xff]
        %v960 = vld [vmem:[%s9 + $0x10] sm:$0xff]
        %v961 = vld [vmem:[%s9 + $0x18] sm:$0xff]
        %v962 = vld [vmem:[%s9 + $0x20] sm:$0xff]
        %v963 = vld [vmem:[%s9 + $0x28] sm:$0xff]
        %v964 = vld [vmem:[%s9 + $0x30] sm:$0xff]
        %v965 = vld [vmem:[%s9 + $0x38] sm:$0xff]
        %v967 = vsel %vm634, %v957, 0
        %969 = vmatpush.msra.mxu0 0.0
        %970 = vmatpush.msra.mxu0 0.0
        %971 = vmatpush.msra.mxu0 0.0
        %972 = vmatpush.msra.mxu0 0.0
        %973 = vmatpush.msra.mxu0 0.0
        %974 = vmatpush.msra.mxu0 0.0
        %975 = vmatpush.msra.mxu0 0.0
        %976 = vmatpush.msra.mxu0 0.0
        %977 = vmatpush.msra.mxu0 0.0
        %978 = vmatpush.msra.mxu0 0.0
        %979 = vmatpush.msra.mxu0 0.0
        %980 = vmatpush.msra.mxu0 0.0
        %981 = vmatpush.msra.mxu0 %v964
        %982 = vmatpush.msra.mxu0 %v962
        %983 = vmatpush.msra.mxu0 %v960
        %984 = vmatpush.msra.mxu0 %v958
        %985 = vmatmul.f32.gmra.mxu0 %v967
        %v986 = vpop.f32.mrf.mxu0
        %v987 = vadd.f32 0.0, %v986
        %988 = vdwg.mxu0
        %989 = vmatpush.msra.mxu0 0.0
        %990 = vmatpush.msra.mxu0 0.0
        %991 = vmatpush.msra.mxu0 0.0
        %992 = vmatpush.msra.mxu0 0.0
        %993 = vmatpush.msra.mxu0 0.0
        %994 = vmatpush.msra.mxu0 0.0
        %995 = vmatpush.msra.mxu0 0.0
        %996 = vmatpush.msra.mxu0 0.0
        %997 = vmatpush.msra.mxu0 0.0
        %998 = vmatpush.msra.mxu0 0.0
        %999 = vmatpush.msra.mxu0 0.0
        %1000 = vmatpush.msra.mxu0 0.0
        %1001 = vmatpush.msra.mxu0 %v965
        %1002 = vmatpush.msra.mxu0 %v963
        %1003 = vmatpush.msra.mxu0 %v961
        %1004 = vmatpush.msra.mxu0 %v959
        %1005 = vmatmul.f32.gmra.mxu0 %v967
        %v1006 = vpop.f32.mrf.mxu0
        %v1007 = vadd.f32 0.0, %v1006
        %1008 = vdwg.mxu0
        %v1009 = vld [vmem:[%s10 + $0x3] sm:$0x1]
        %v1010 = vperm.slane %v1009, 0
        %v1011 = vmul.f32 %v1010, %v987
        %v1013 = vrot.slane %v987, 7
        %vm1015 = vcmask 1040384
        %v1016 = vsel %vm1015, 0.0, %v1013
        %v1017 = vld [vmem:[%s10 + $0x2] sm:$0x1]
        %v1018 = vperm.slane %v1017, 0
        %v1019 = vmul.f32 %v1018, %v1016
        %v1020 = vadd.f32 %v1011, %v1019
        %v1021 = vrot.slane %v987, 6
        %vm1023 = vcmask 1041408
        %v1024 = vsel %vm1023, 0.0, %v1021
        %v1025 = vld [vmem:[%s10 + $0x1] sm:$0x1]
        %v1026 = vperm.slane %v1025, 0
        %v1027 = vmul.f32 %v1026, %v1024
        %v1028 = vadd.f32 %v1020, %v1027
        %v1029 = vrot.slane %v987, 5
        %vm1031 = vcmask 1042432
        %v1032 = vsel %vm1031, 0.0, %v1029
        %v1033 = vld [vmem:[%s10] sm:$0x1]
        %v1034 = vperm.slane %v1033, 0
        %v1035 = vmul.f32 %v1034, %v1032
        %v1036 = vadd.f32 %v1028, %v1035
        %v1037 = vld [vmem:[%s11] sm:$0x1]
        %v1039 = vperm.slane %v1037, 0
        %v1041 = vadd.f32 %v1036, %v1039
        %v1042 = vxor.u32 %v1041, 2147483648
        %v1043 = vmul.f32 %v1042, 1.442695
        %v1044 = vpow.pop %v1043
        %v1045 = vadd.f32 %v1044, 1.0
        %v1046 = vrcp.pop %v1045
        %v1047 = vmul.f32 %v1045, %v1046
        %v1048 = vsub.f32 1.0, %v1047
        %v1049 = vmul.f32 %v1046, %v1048
        %v1050 = vadd.f32 %v1046, %v1049
        %vm1051 = vweird.f32 %v1045
        %vm1052 = vweird.f32 %v1046
        %vm1053 = vmor %vm1051, %vm1052
        %v1054 = vsel %vm1053, %v1046, %v1050
        %v1055 = vand.u32 2147483647, %v1045
        %vm1056 = vcmp.eq.f32.partialorder %v1055, 8.507059e+37
        %v1057 = vand.u32 %v1045, 2147483648
        %v1058 = vor.u32 1.1754944e-38, %v1057
        %v1059 = vsel %vm1056, %v1058, %v1054
        %v1060 = vmul.f32 1.0, %v1059
        %v1061 = vmul.f32 %v1041, %v1060
        %v1062 = vld [vmem:[%s12] sm:$0xff]
        %v1063 = vld [vmem:[%s12 + $0x8] sm:$0xff]
        %v1064 = vld [vmem:[%s12 + $0x10] sm:$0xff]
        %v1065 = vld [vmem:[%s12 + $0x18] sm:$0xff]
        %v1066 = vld [vmem:[%s12 + $0x20] sm:$0xff]
        %v1067 = vld [vmem:[%s12 + $0x28] sm:$0xff]
        %v1068 = vld [vmem:[%s12 + $0x30] sm:$0xff]
        %v1069 = vld [vmem:[%s12 + $0x38] sm:$0xff]
        %v1070 = vld [vmem:[%s12 + $0x40] sm:$0xff]
        %v1071 = vld [vmem:[%s12 + $0x48] sm:$0xff]
        %v1072 = vld [vmem:[%s12 + $0x50] sm:$0xff]
        %v1073 = vld [vmem:[%s12 + $0x58] sm:$0xff]
        %v1074 = vld [vmem:[%s12 + $0x60] sm:$0xff]
        %v1075 = vld [vmem:[%s12 + $0x68] sm:$0xff]
        %v1076 = vld [vmem:[%s12 + $0x70] sm:$0xff]
        %v1077 = vld [vmem:[%s12 + $0x78] sm:$0xff]
        %1078 = vmatpush.msra.mxu0 %v1077
        %1079 = vmatpush.msra.mxu0 %v1076
        %1080 = vmatpush.msra.mxu0 %v1075
        %1081 = vmatpush.msra.mxu0 %v1074
        %1082 = vmatpush.msra.mxu0 %v1073
        %1083 = vmatpush.msra.mxu0 %v1072
        %1084 = vmatpush.msra.mxu0 %v1071
        %1085 = vmatpush.msra.mxu0 %v1070
        %1086 = vmatpush.msra.mxu0 %v1069
        %1087 = vmatpush.msra.mxu0 %v1068
        %1088 = vmatpush.msra.mxu0 %v1067
        %1089 = vmatpush.msra.mxu0 %v1066
        %1090 = vmatpush.msra.mxu0 %v1065
        %1091 = vmatpush.msra.mxu0 %v1064
        %1092 = vmatpush.msra.mxu0 %v1063
        %1093 = vmatpush.msra.mxu0 %v1062
        %1094 = vmatmul.f32.gmra.mxu0 %v1061
        %v1095 = vpop.f32.mrf.mxu0
        %v1096 = vadd.f32 0.0, %v1095
        %1097 = vdwg.mxu0
        %v1098 = vld [vmem:[%s13] sm:$0xff]
        %v1099 = vld [vmem:[%s13 + $0x8] sm:$0xff]
        %v1100 = vld [vmem:[%s13 + $0x10] sm:$0xff]
        %v1101 = vld [vmem:[%s13 + $0x18] sm:$0xff]
        %v1102 = vld [vmem:[%s13 + $0x20] sm:$0xff]
        %v1103 = vld [vmem:[%s13 + $0x28] sm:$0xff]
        %v1104 = vld [vmem:[%s13 + $0x30] sm:$0xff]
        %v1105 = vld [vmem:[%s13 + $0x38] sm:$0xff]
        %v1106 = vld [vmem:[%s13 + $0x40] sm:$0xff]
        %v1107 = vld [vmem:[%s13 + $0x48] sm:$0xff]
        %v1108 = vld [vmem:[%s13 + $0x50] sm:$0xff]
        %v1109 = vld [vmem:[%s13 + $0x58] sm:$0xff]
        %v1110 = vld [vmem:[%s13 + $0x60] sm:$0xff]
        %v1111 = vld [vmem:[%s13 + $0x68] sm:$0xff]
        %v1112 = vld [vmem:[%s13 + $0x70] sm:$0xff]
        %v1113 = vld [vmem:[%s13 + $0x78] sm:$0xff]
        %1114 = vmatpush.msra.mxu0 %v1113
        %1115 = vmatpush.msra.mxu0 %v1112
        %1116 = vmatpush.msra.mxu0 %v1111
        %1117 = vmatpush.msra.mxu0 %v1110
        %1118 = vmatpush.msra.mxu0 %v1109
        %1119 = vmatpush.msra.mxu0 %v1108
        %1120 = vmatpush.msra.mxu0 %v1107
        %1121 = vmatpush.msra.mxu0 %v1106
        %1122 = vmatpush.msra.mxu0 %v1105
        %1123 = vmatpush.msra.mxu0 %v1104
        %1124 = vmatpush.msra.mxu0 %v1103
        %1125 = vmatpush.msra.mxu0 %v1102
        %1126 = vmatpush.msra.mxu0 %v1101
        %1127 = vmatpush.msra.mxu0 %v1100
        %1128 = vmatpush.msra.mxu0 %v1099
        %1129 = vmatpush.msra.mxu0 %v1098
        %1130 = vmatmul.f32.gmra.mxu0 %v1061
        %v1131 = vpop.f32.mrf.mxu0
        %v1132 = vadd.f32 0.0, %v1131
        %1133 = vdwg.mxu0
        %v1134 = vld [vmem:[%s14] sm:$0xff]
        %v1135 = vld [vmem:[%s14 + $0x8] sm:$0xff]
        %v1136 = vld [vmem:[%s14 + $0x10] sm:$0xff]
        %v1137 = vld [vmem:[%s14 + $0x18] sm:$0xff]
        %v1138 = vld [vmem:[%s14 + $0x20] sm:$0xff]
        %v1139 = vld [vmem:[%s14 + $0x28] sm:$0xff]
        %v1140 = vld [vmem:[%s14 + $0x30] sm:$0xff]
        %v1141 = vld [vmem:[%s14 + $0x38] sm:$0xff]
        %v1142 = vld [vmem:[%s14 + $0x40] sm:$0xff]
        %v1143 = vld [vmem:[%s14 + $0x48] sm:$0xff]
        %v1144 = vld [vmem:[%s14 + $0x50] sm:$0xff]
        %v1145 = vld [vmem:[%s14 + $0x58] sm:$0xff]
        %v1146 = vld [vmem:[%s14 + $0x60] sm:$0xff]
        %v1147 = vld [vmem:[%s14 + $0x68] sm:$0xff]
        %v1148 = vld [vmem:[%s14 + $0x70] sm:$0xff]
        %v1149 = vld [vmem:[%s14 + $0x78] sm:$0xff]
        %1150 = vmatpush.msra.mxu0 %v1149
        %1151 = vmatpush.msra.mxu0 %v1148
        %1152 = vmatpush.msra.mxu0 %v1147
        %1153 = vmatpush.msra.mxu0 %v1146
        %1154 = vmatpush.msra.mxu0 %v1145
        %1155 = vmatpush.msra.mxu0 %v1144
        %1156 = vmatpush.msra.mxu0 %v1143
        %1157 = vmatpush.msra.mxu0 %v1142
        %1158 = vmatpush.msra.mxu0 %v1141
        %1159 = vmatpush.msra.mxu0 %v1140
        %1160 = vmatpush.msra.mxu0 %v1139
        %1161 = vmatpush.msra.mxu0 %v1138
        %1162 = vmatpush.msra.mxu0 %v1137
        %1163 = vmatpush.msra.mxu0 %v1136
        %1164 = vmatpush.msra.mxu0 %v1135
        %1165 = vmatpush.msra.mxu0 %v1134
        %1166 = vmatmul.f32.gmra.mxu0 %v1061
        %v1167 = vpop.f32.mrf.mxu0
        %v1168 = vadd.f32 0.0, %v1167
        %1169 = vdwg.mxu0
        %v1170 = vld [vmem:[%s15] sm:$0x3]
        %v1171 = vld [vmem:[%s16] sm:$0x1]
        %v1173 = vperm.slane %v1171, 0
        %vm1175 = vcmask 15360
        %v1177 = vsel %vm1175, %v1096, 0
        %v1180 = vsel %vm1023, %v1170, 0
        %1182 = vmatpush.msra.mxu0 0.0
        %1183 = vmatpush.msra.mxu0 0.0
        %1184 = vmatpush.msra.mxu0 0.0
        %1185 = vmatpush.msra.mxu0 0.0
        %1186 = vmatpush.msra.mxu0 0.0
        %1187 = vmatpush.msra.mxu0 0.0
        %1188 = vmatpush.msra.mxu0 0.0
        %1189 = vmatpush.msra.mxu0 0.0
        %1190 = vmatpush.msra.mxu0 0.0
        %1191 = vmatpush.msra.mxu0 0.0
        %1192 = vmatpush.msra.mxu0 0.0
        %1193 = vmatpush.msra.mxu0 0.0
        %1194 = vmatpush.msra.mxu0 0.0
        %1195 = vmatpush.msra.mxu0 0.0
        %1196 = vmatpush.msra.mxu0 0.0
        %1197 = vmatpush.msra.mxu0 %v1180
        %1198 = vmatmul.f32.gmra.mxu0 %v1177
        %v1199 = vpop.f32.mrf.mxu0
        %v1200 = vadd.f32 %v1173, %v1199
        %1201 = vdwg.mxu0
        %v1202 = vmax.f32 %v1200, 0.0
        %vm1203 = vcmp.ne.f32.partialorder %v1200, %v1200
        %v1204 = vadd.f32 %v1200, 0.0
        %v1205 = vand.u32 2147483647, %v1200
        %v1206 = vsub.f32 0.0, %v1205
        %v1207 = vmul.f32 %v1206, 1.442695
        %v1208 = vpow.pop %v1207
        %v1209 = vadd.f32 %v1208, 1.0
        %v1210 = vlog2.pop %v1209
        %v1211 = vmul.f32 %v1210, 0.6931472
        %v1212 = vmul.f32 -0.5, %v1208
        %v1213 = vadd.f32 %v1212, 1.0
        %v1214 = vmul.f32 %v1213, %v1208
        %v1215 = vand.u32 2147483647, %v1208
        %vm1216 = vcmp.lt.f32.partialorder %v1215, 0.0004427343
        %v1217 = vsel %vm1216, %v1214, %v1211
        %v1218 = vadd.f32 %v1202, %v1217
        %v1219 = vsel %vm1203, %v1204, %v1218
        %v1220 = vld [vmem:[%s17] sm:$0xff]
        %v1221 = vld [vmem:[%s17 + $0x8] sm:$0xff]
        %1222 = vst [vmem:[#allocation2] sm:$0xff] %v1061
        %1223 = vst [vmem:[#allocation3] sm:$0xff] %v1219
        %1224 = vst.msk [vmem:[#allocation4] sm:$0xff] %vm922, %v1132
        %1225 = vst.msk [vmem:[#allocation5] sm:$0xff] %vm922, %v1168
        %1226 = vst [vmem:[#allocation7] sm:$0xff] 0.0
        %1227 = vst [vmem:[#allocation7 + $0x8] sm:$0xff] 0.0
        %v1228 = vld [vmem:[#allocation3] sm:$0xff]
        %v1229 = vld [vmem:[#allocation2] sm:$0xff]
        %v1230 = vmul.f32 %v1228, %v1229
        %v1231 = vld [vmem:[#allocation4] sm:$0xff]
        %1232 = vxpose.xlu0.b32.start [1/16] %v1231, 128
        %1233 = vxpose.xlu0.b32.cont [2/16] 0.0, 128
        %1234 = vxpose.xlu0.b32.cont [3/16] 0.0, 128
        %1235 = vxpose.xlu0.b32.cont [4/16] 0.0, 128
        %1236 = vxpose.xlu0.b32.cont [5/16] 0.0, 128
        %1237 = vxpose.xlu0.b32.cont [6/16] 0.0, 128
        %1238 = vxpose.xlu0.b32.cont [7/16] 0.0, 128
        %1239 = vxpose.xlu0.b32.cont [8/16] 0.0, 128
        %1240 = vxpose.xlu0.b32.cont [9/16] 0.0, 128
        %1241 = vxpose.xlu0.b32.cont [10/16] 0.0, 128
        %1242 = vxpose.xlu0.b32.cont [11/16] 0.0, 128
        %1243 = vxpose.xlu0.b32.cont [12/16] 0.0, 128
        %1244 = vxpose.xlu0.b32.cont [13/16] 0.0, 128
        %1245 = vxpose.xlu0.b32.cont [14/16] 0.0, 128
        %1246 = vxpose.xlu0.b32.cont [15/16] 0.0, 128
        %1247 = vxpose.xlu0.b32.end [16/16] 0.0, 128
        %v1248 = vpop.trf.xlu0
        %v1249 = vpop.trf.xlu0
        %v1250 = vpop.trf.xlu0
        %v1251 = vpop.trf.xlu0
        %v1252 = vpop.trf.xlu0
        %v1253 = vpop.trf.xlu0
        %v1254 = vpop.trf.xlu0
        %v1255 = vpop.trf.xlu0
        %v1256 = vpop.trf.xlu0
        %v1257 = vpop.trf.xlu0
        %v1258 = vpop.trf.xlu0
        %v1259 = vpop.trf.xlu0
        %v1260 = vpop.trf.xlu0
        %v1261 = vpop.trf.xlu0
        %v1262 = vpop.trf.xlu0
        %v1263 = vpop.trf.xlu0
        %v1264 = vld [vmem:[#allocation5] sm:$0xff]
        %1265 = vxpose.xlu0.b32.start [1/16] %v1264, 128
        %1266 = vxpose.xlu0.b32.cont [2/16] 0.0, 128
        %1267 = vxpose.xlu0.b32.cont [3/16] 0.0, 128
        %1268 = vxpose.xlu0.b32.cont [4/16] 0.0, 128
        %1269 = vxpose.xlu0.b32.cont [5/16] 0.0, 128
        %1270 = vxpose.xlu0.b32.cont [6/16] 0.0, 128
        %1271 = vxpose.xlu0.b32.cont [7/16] 0.0, 128
        %1272 = vxpose.xlu0.b32.cont [8/16] 0.0, 128
        %1273 = vxpose.xlu0.b32.cont [9/16] 0.0, 128
        %1274 = vxpose.xlu0.b32.cont [10/16] 0.0, 128
        %1275 = vxpose.xlu0.b32.cont [11/16] 0.0, 128
        %1276 = vxpose.xlu0.b32.cont [12/16] 0.0, 128
        %1277 = vxpose.xlu0.b32.cont [13/16] 0.0, 128
        %1278 = vxpose.xlu0.b32.cont [14/16] 0.0, 128
        %1279 = vxpose.xlu0.b32.cont [15/16] 0.0, 128
        %1280 = vxpose.xlu0.b32.end [16/16] 0.0, 128
        %v1281 = vpop.trf.xlu0
        %v1282 = vpop.trf.xlu0
        %v1283 = vpop.trf.xlu0
        %v1284 = vpop.trf.xlu0
        %v1285 = vpop.trf.xlu0
        %v1286 = vpop.trf.xlu0
        %v1287 = vpop.trf.xlu0
        %v1288 = vpop.trf.xlu0
        %v1289 = vpop.trf.xlu0
        %v1290 = vpop.trf.xlu0
        %v1291 = vpop.trf.xlu0
        %v1292 = vpop.trf.xlu0
        %v1293 = vpop.trf.xlu0
        %v1294 = vpop.trf.xlu0
        %v1295 = vpop.trf.xlu0
        %v1296 = vpop.trf.xlu0
        %v1297 = vld [vmem:[#allocation7] sm:$0xff]
        %v1298 = vld [vmem:[#allocation7 + $0x8] sm:$0xff]
        %v1299 = vperm.slane %v1228, 0
        %v1300 = vmul.f32 %v1299, %v1220
        %v1301 = vmul.f32 %v1299, %v1221
        %v1302 = vmul.f32 %v1300, 1.442695
        %v1303 = vpow.pop %v1302
        %v1304 = vmul.f32 %v1301, 1.442695
        %v1305 = vpow.pop %v1304
        %v1306 = vperm.slane %v1230, 0
        %1308 = vset.pattern.permute.xlu0 0
        %1309 = vperm.xlu0 %1308, %v1248
        %v1310 = vpop.permute.xlu0 %1309
        %1313 = vset.pattern.permute.xlu0 0
        %1314 = vperm.xlu0 %1313, %v1249
        %v1315 = vpop.permute.xlu0 %1314
        %v1317 = vmul.f32 %v1306, %v1310
        %v1318 = vmul.f32 %v1306, %v1315
        %v1319 = vmul.f32 %v1303, %v1297
        %v1320 = vmul.f32 %v1305, %v1298
        %v1321 = vadd.f32 %v1319, %v1317
        %v1322 = vadd.f32 %v1320, %v1318
        %1324 = vset.pattern.permute.xlu0 0
        %1325 = vperm.xlu0 %1324, %v1281
        %v1326 = vpop.permute.xlu0 %1325
        %1329 = vset.pattern.permute.xlu0 0
        %1330 = vperm.xlu0 %1329, %v1282
        %v1331 = vpop.permute.xlu0 %1330
        %v1333 = vmul.f32 %v1321, %v1326
        %v1334 = vmul.f32 %v1322, %v1331
        %v1335 = vadd.f32 %v1333, %v1334
        %v1336 = vrot.slane %v1335, 4
        %v1337 = vadd.f32 %v1335, %v1336
        %v1338 = vrot.slane %v1337, 2
        %v1339 = vadd.f32 %v1337, %v1338
        %v1340 = vrot.slane %v1339, 1
        %v1341 = vadd.f32 %v1339, %v1340
        %v1342 = vperm.slane %v1228, 1
        %v1343 = vmul.f32 %v1342, %v1220
        %v1344 = vmul.f32 %v1342, %v1221
        %v1345 = vmul.f32 %v1343, 1.442695
        %v1346 = vpow.pop %v1345
        %v1347 = vmul.f32 %v1344, 1.442695
        %v1348 = vpow.pop %v1347
        %v1349 = vperm.slane %v1230, 1
        %1350 = vset.pattern.permute.xlu0 1
        %1351 = vperm.xlu0 %1350, %v1248
        %v1352 = vpop.permute.xlu0 %1351
        %1354 = vset.pattern.permute.xlu0 1
        %1355 = vperm.xlu0 %1354, %v1249
        %v1356 = vpop.permute.xlu0 %1355
        %v1358 = vmul.f32 %v1349, %v1352
        %v1359 = vmul.f32 %v1349, %v1356
        %v1360 = vmul.f32 %v1346, %v1321
        %v1361 = vmul.f32 %v1348, %v1322
        %v1362 = vadd.f32 %v1360, %v1358
        %v1363 = vadd.f32 %v1361, %v1359
        %1364 = vset.pattern.permute.xlu0 1
        %1365 = vperm.xlu0 %1364, %v1281
        %v1366 = vpop.permute.xlu0 %1365
        %1368 = vset.pattern.permute.xlu0 1
        %1369 = vperm.xlu0 %1368, %v1282
        %v1370 = vpop.permute.xlu0 %1369
        %v1372 = vmul.f32 %v1362, %v1366
        %v1373 = vmul.f32 %v1363, %v1370
        %v1374 = vadd.f32 %v1372, %v1373
        %v1375 = vrot.slane %v1374, 4
        %v1376 = vadd.f32 %v1374, %v1375
        %v1377 = vrot.slane %v1376, 2
        %v1378 = vadd.f32 %v1376, %v1377
        %v1379 = vrot.slane %v1378, 1
        %v1380 = vadd.f32 %v1378, %v1379
        %v1381 = vperm.slane %v1228, 2
        %v1382 = vmul.f32 %v1381, %v1220
        %v1383 = vmul.f32 %v1381, %v1221
        %v1384 = vmul.f32 %v1382, 1.442695
        %v1385 = vpow.pop %v1384
        %v1386 = vmul.f32 %v1383, 1.442695
        %v1387 = vpow.pop %v1386
        %v1388 = vperm.slane %v1230, 2
        %1389 = vset.pattern.permute.xlu0 2
        %1390 = vperm.xlu0 %1389, %v1248
        %v1391 = vpop.permute.xlu0 %1390
        %1393 = vset.pattern.permute.xlu0 2
        %1394 = vperm.xlu0 %1393, %v1249
        %v1395 = vpop.permute.xlu0 %1394
        %v1397 = vmul.f32 %v1388, %v1391
        %v1398 = vmul.f32 %v1388, %v1395
        %v1399 = vmul.f32 %v1385, %v1362
        %v1400 = vmul.f32 %v1387, %v1363
        %v1401 = vadd.f32 %v1399, %v1397
        %v1402 = vadd.f32 %v1400, %v1398
        %1403 = vset.pattern.permute.xlu0 2
        %1404 = vperm.xlu0 %1403, %v1281
        %v1405 = vpop.permute.xlu0 %1404
        %1407 = vset.pattern.permute.xlu0 2
        %1408 = vperm.xlu0 %1407, %v1282
        %v1409 = vpop.permute.xlu0 %1408
        %v1411 = vmul.f32 %v1401, %v1405
        %v1412 = vmul.f32 %v1402, %v1409
        %v1413 = vadd.f32 %v1411, %v1412
        %v1414 = vrot.slane %v1413, 4
        %v1415 = vadd.f32 %v1413, %v1414
        %v1416 = vrot.slane %v1415, 2
        %v1417 = vadd.f32 %v1415, %v1416
        %v1418 = vrot.slane %v1417, 1
        %v1419 = vadd.f32 %v1417, %v1418
        %v1420 = vperm.slane %v1228, 3
        %v1421 = vmul.f32 %v1420, %v1220
        %v1422 = vmul.f32 %v1420, %v1221
        %v1423 = vmul.f32 %v1421, 1.442695
        %v1424 = vpow.pop %v1423
        %v1425 = vmul.f32 %v1422, 1.442695
        %v1426 = vpow.pop %v1425
        %v1427 = vperm.slane %v1230, 3
        %1428 = vset.pattern.permute.xlu0 3
        %1429 = vperm.xlu0 %1428, %v1248
        %v1430 = vpop.permute.xlu0 %1429
        %1432 = vset.pattern.permute.xlu0 3
        %1433 = vperm.xlu0 %1432, %v1249
        %v1434 = vpop.permute.xlu0 %1433
        %v1436 = vmul.f32 %v1427, %v1430
        %v1437 = vmul.f32 %v1427, %v1434
        %v1438 = vmul.f32 %v1424, %v1401
        %v1439 = vmul.f32 %v1426, %v1402
        %v1440 = vadd.f32 %v1438, %v1436
        %v1441 = vadd.f32 %v1439, %v1437
        %1442 = vset.pattern.permute.xlu0 3
        %1443 = vperm.xlu0 %1442, %v1281
        %v1444 = vpop.permute.xlu0 %1443
        %1446 = vset.pattern.permute.xlu0 3
        %1447 = vperm.xlu0 %1446, %v1282
        %v1448 = vpop.permute.xlu0 %1447
        %v1450 = vmul.f32 %v1440, %v1444
        %v1451 = vmul.f32 %v1441, %v1448
        %v1452 = vadd.f32 %v1450, %v1451
        %v1453 = vrot.slane %v1452, 4
        %v1454 = vadd.f32 %v1452, %v1453
        %v1455 = vrot.slane %v1454, 2
        %v1456 = vadd.f32 %v1454, %v1455
        %v1457 = vrot.slane %v1456, 1
        %v1458 = vadd.f32 %v1456, %v1457
        %v1459 = vperm.slane %v1228, 4
        %v1460 = vmul.f32 %v1459, %v1220
        %v1461 = vmul.f32 %v1459, %v1221
        %v1462 = vmul.f32 %v1460, 1.442695
        %v1463 = vpow.pop %v1462
        %v1464 = vmul.f32 %v1461, 1.442695
        %v1465 = vpow.pop %v1464
        %v1466 = vperm.slane %v1230, 4
        %1467 = vset.pattern.permute.xlu0 4
        %1468 = vperm.xlu0 %1467, %v1248
        %v1469 = vpop.permute.xlu0 %1468
        %1471 = vset.pattern.permute.xlu0 4
        %1472 = vperm.xlu0 %1471, %v1249
        %v1473 = vpop.permute.xlu0 %1472
        %v1475 = vmul.f32 %v1466, %v1469
        %v1476 = vmul.f32 %v1466, %v1473
        %v1477 = vmul.f32 %v1463, %v1440
        %v1478 = vmul.f32 %v1465, %v1441
        %v1479 = vadd.f32 %v1477, %v1475
        %v1480 = vadd.f32 %v1478, %v1476
        %1481 = vset.pattern.permute.xlu0 4
        %1482 = vperm.xlu0 %1481, %v1281
        %v1483 = vpop.permute.xlu0 %1482
        %1485 = vset.pattern.permute.xlu0 4
        %1486 = vperm.xlu0 %1485, %v1282
        %v1487 = vpop.permute.xlu0 %1486
        %v1489 = vmul.f32 %v1479, %v1483
        %v1490 = vmul.f32 %v1480, %v1487
        %v1491 = vadd.f32 %v1489, %v1490
        %v1492 = vrot.slane %v1491, 4
        %v1493 = vadd.f32 %v1491, %v1492
        %v1494 = vrot.slane %v1493, 2
        %v1495 = vadd.f32 %v1493, %v1494
        %v1496 = vrot.slane %v1495, 1
        %v1497 = vadd.f32 %v1495, %v1496
        %v1498 = vperm.slane %v1228, 5
        %v1499 = vmul.f32 %v1498, %v1220
        %v1500 = vmul.f32 %v1498, %v1221
        %v1501 = vmul.f32 %v1499, 1.442695
        %v1502 = vpow.pop %v1501
        %v1503 = vmul.f32 %v1500, 1.442695
        %v1504 = vpow.pop %v1503
        %v1505 = vperm.slane %v1230, 5
        %1506 = vset.pattern.permute.xlu0 5
        %1507 = vperm.xlu0 %1506, %v1248
        %v1508 = vpop.permute.xlu0 %1507
        %1510 = vset.pattern.permute.xlu0 5
        %1511 = vperm.xlu0 %1510, %v1249
        %v1512 = vpop.permute.xlu0 %1511
        %v1514 = vmul.f32 %v1505, %v1508
        %v1515 = vmul.f32 %v1505, %v1512
        %v1516 = vmul.f32 %v1502, %v1479
        %v1517 = vmul.f32 %v1504, %v1480
        %v1518 = vadd.f32 %v1516, %v1514
        %v1519 = vadd.f32 %v1517, %v1515
        %1520 = vset.pattern.permute.xlu0 5
        %1521 = vperm.xlu0 %1520, %v1281
        %v1522 = vpop.permute.xlu0 %1521
        %1524 = vset.pattern.permute.xlu0 5
        %1525 = vperm.xlu0 %1524, %v1282
        %v1526 = vpop.permute.xlu0 %1525
        %v1528 = vmul.f32 %v1518, %v1522
        %v1529 = vmul.f32 %v1519, %v1526
        %v1530 = vadd.f32 %v1528, %v1529
        %v1531 = vrot.slane %v1530, 4
        %v1532 = vadd.f32 %v1530, %v1531
        %v1533 = vrot.slane %v1532, 2
        %v1534 = vadd.f32 %v1532, %v1533
        %v1535 = vrot.slane %v1534, 1
        %v1536 = vadd.f32 %v1534, %v1535
        %v1537 = vperm.slane %v1228, 6
        %v1538 = vmul.f32 %v1537, %v1220
        %v1539 = vmul.f32 %v1537, %v1221
        %v1540 = vmul.f32 %v1538, 1.442695
        %v1541 = vpow.pop %v1540
        %v1542 = vmul.f32 %v1539, 1.442695
        %v1543 = vpow.pop %v1542
        %v1544 = vperm.slane %v1230, 6
        %1545 = vset.pattern.permute.xlu0 6
        %1546 = vperm.xlu0 %1545, %v1248
        %v1547 = vpop.permute.xlu0 %1546
        %1549 = vset.pattern.permute.xlu0 6
        %1550 = vperm.xlu0 %1549, %v1249
        %v1551 = vpop.permute.xlu0 %1550
        %v1553 = vmul.f32 %v1544, %v1547
        %v1554 = vmul.f32 %v1544, %v1551
        %v1555 = vmul.f32 %v1541, %v1518
        %v1556 = vmul.f32 %v1543, %v1519
        %v1557 = vadd.f32 %v1555, %v1553
        %v1558 = vadd.f32 %v1556, %v1554
        %1559 = vset.pattern.permute.xlu0 6
        %1560 = vperm.xlu0 %1559, %v1281
        %v1561 = vpop.permute.xlu0 %1560
        %1563 = vset.pattern.permute.xlu0 6
        %1564 = vperm.xlu0 %1563, %v1282
        %v1565 = vpop.permute.xlu0 %1564
        %v1567 = vmul.f32 %v1557, %v1561
        %v1568 = vmul.f32 %v1558, %v1565
        %v1569 = vadd.f32 %v1567, %v1568
        %v1570 = vrot.slane %v1569, 4
        %v1571 = vadd.f32 %v1569, %v1570
        %v1572 = vrot.slane %v1571, 2
        %v1573 = vadd.f32 %v1571, %v1572
        %v1574 = vrot.slane %v1573, 1
        %v1575 = vadd.f32 %v1573, %v1574
        %v1576 = vperm.slane %v1228, 7
        %v1577 = vmul.f32 %v1576, %v1220
        %v1578 = vmul.f32 %v1576, %v1221
        %v1579 = vmul.f32 %v1577, 1.442695
        %v1580 = vpow.pop %v1579
        %v1581 = vmul.f32 %v1578, 1.442695
        %v1582 = vpow.pop %v1581
        %v1583 = vperm.slane %v1230, 7
        %1584 = vset.pattern.permute.xlu0 7
        %1585 = vperm.xlu0 %1584, %v1248
        %v1586 = vpop.permute.xlu0 %1585
        %1588 = vset.pattern.permute.xlu0 7
        %1589 = vperm.xlu0 %1588, %v1249
        %v1590 = vpop.permute.xlu0 %1589
        %v1592 = vmul.f32 %v1583, %v1586
        %v1593 = vmul.f32 %v1583, %v1590
        %v1594 = vmul.f32 %v1580, %v1557
        %v1595 = vmul.f32 %v1582, %v1558
        %v1596 = vadd.f32 %v1594, %v1592
        %v1597 = vadd.f32 %v1595, %v1593
        %1598 = vset.pattern.permute.xlu0 7
        %1599 = vperm.xlu0 %1598, %v1281
        %v1600 = vpop.permute.xlu0 %1599
        %1602 = vset.pattern.permute.xlu0 7
        %1603 = vperm.xlu0 %1602, %v1282
        %v1604 = vpop.permute.xlu0 %1603
        %v1606 = vmul.f32 %v1596, %v1600
        %v1607 = vmul.f32 %v1597, %v1604
        %v1608 = vadd.f32 %v1606, %v1607
        %v1609 = vrot.slane %v1608, 4
        %v1610 = vadd.f32 %v1608, %v1609
        %v1611 = vrot.slane %v1610, 2
        %v1612 = vadd.f32 %v1610, %v1611
        %v1613 = vrot.slane %v1612, 1
        %v1614 = vadd.f32 %v1612, %v1613
        %1615 = vst [vmem:[#allocation7] sm:$0xff] %v1596
        %1616 = vst [vmem:[#allocation7 + $0x8] sm:$0xff] %v1597
        %v1617 = vsel %vm1015, %v1341, %v1380
        %v1618 = vsel %vm1023, %v1617, %v1419
        %v1619 = vsel %vm1031, %v1618, %v1458
        %vm1620 = vcmask 1043456
        %v1621 = vsel %vm1620, %v1619, %v1497
        %vm1622 = vcmask 1044480
        %v1623 = vsel %vm1622, %v1621, %v1536
        %vm1624 = vcmask 1045504
        %v1625 = vsel %vm1624, %v1623, %v1575
        %vm1626 = vcmask 1046528
        %v1627 = vsel %vm1626, %v1625, %v1614
        %1628 = vst [vmem:[#allocation6] sm:$0xff] %v1627
        %v1629 = vld [vmem:[#allocation6] sm:$0xff]
        %v1630 = vld [vmem:[%s18] sm:$0x1]
        %v1632 = vperm.slane %v1630, 0
        %v1634 = vmul.f32 %v1061, %v1632
        %v1635 = vadd.f32 %v1629, %v1634
        %v1636 = vxor.u32 %v1007, 2147483648
        %v1637 = vmul.f32 %v1636, 1.442695
        %v1638 = vpow.pop %v1637
        %v1639 = vadd.f32 %v1638, 1.0
        %v1640 = vrcp.pop %v1639
        %v1641 = vmul.f32 %v1639, %v1640
        %v1642 = vsub.f32 1.0, %v1641
        %v1643 = vmul.f32 %v1640, %v1642
        %v1644 = vadd.f32 %v1640, %v1643
        %vm1645 = vweird.f32 %v1639
        %vm1646 = vweird.f32 %v1640
        %vm1647 = vmor %vm1645, %vm1646
        %v1648 = vsel %vm1647, %v1640, %v1644
        %v1649 = vand.u32 2147483647, %v1639
        %vm1650 = vcmp.eq.f32.partialorder %v1649, 8.507059e+37
        %v1651 = vand.u32 %v1639, 2147483648
        %v1652 = vor.u32 1.1754944e-38, %v1651
        %v1653 = vsel %vm1650, %v1652, %v1648
        %v1654 = vmul.f32 1.0, %v1653
        %v1655 = vmul.f32 %v1007, %v1654
        %v1656 = vmul.f32 %v1635, %v1655
        %v1657 = vld [vmem:[%s19] sm:$0xff]
        %v1658 = vld [vmem:[%s19 + $0x8] sm:$0xff]
        %v1659 = vld [vmem:[%s19 + $0x10] sm:$0xff]
        %v1660 = vld [vmem:[%s19 + $0x18] sm:$0xff]
        %v1661 = vld [vmem:[%s19 + $0x20] sm:$0xff]
        %v1662 = vld [vmem:[%s19 + $0x28] sm:$0xff]
        %v1663 = vld [vmem:[%s19 + $0x30] sm:$0xff]
        %v1664 = vld [vmem:[%s19 + $0x38] sm:$0xff]
        %v1665 = vld [vmem:[%s19 + $0x40] sm:$0xff]
        %v1666 = vld [vmem:[%s19 + $0x48] sm:$0xff]
        %v1667 = vld [vmem:[%s19 + $0x50] sm:$0xff]
        %v1668 = vld [vmem:[%s19 + $0x58] sm:$0xff]
        %v1669 = vld [vmem:[%s19 + $0x60] sm:$0xff]
        %v1670 = vld [vmem:[%s19 + $0x68] sm:$0xff]
        %v1671 = vld [vmem:[%s19 + $0x70] sm:$0xff]
        %v1672 = vld [vmem:[%s19 + $0x78] sm:$0xff]
        %1673 = vmatpush.msra.mxu0 %v1672
        %1674 = vmatpush.msra.mxu0 %v1671
        %1675 = vmatpush.msra.mxu0 %v1670
        %1676 = vmatpush.msra.mxu0 %v1669
        %1677 = vmatpush.msra.mxu0 %v1668
        %1678 = vmatpush.msra.mxu0 %v1667
        %1679 = vmatpush.msra.mxu0 %v1666
        %1680 = vmatpush.msra.mxu0 %v1665
        %1681 = vmatpush.msra.mxu0 %v1664
        %1682 = vmatpush.msra.mxu0 %v1663
        %1683 = vmatpush.msra.mxu0 %v1662
        %1684 = vmatpush.msra.mxu0 %v1661
        %1685 = vmatpush.msra.mxu0 %v1660
        %1686 = vmatpush.msra.mxu0 %v1659
        %1687 = vmatpush.msra.mxu0 %v1658
        %1688 = vmatpush.msra.mxu0 %v1657
        %1689 = vmatmul.f32.gmra.mxu0 %v1656
        %v1690 = vpop.f32.mrf.mxu0
        %v1691 = vadd.f32 %v957, %v1690
        %1692 = vdwg.mxu0
        %1693 = vst.msk [vmem:[%s620] sm:$0xff] %vm634, %v1691
        %s1694 = sand.u32 %s467, 1
        %s1695 = scalar_lea.sflag [#allocation9], %s1694
        %s1696 = sand.u32 %s467, 1
        %s1697 = smul.addr %s1696, 8
        %s1698 = scalar_lea.vmem [#allocation8], %s1697
        // Predicated region
        $region101: #{tpu_custom_call.1} parent=99 // pred_check
          %p1699 = pneg %p477
        $region102: #{tpu_custom_call.1} parent=99 // pred_check_branch
          %1701 = sbr.rel (%p1699) target = $region104
        $region103: #{tpu_custom_call.1} parent=99 // pred_region
          %1703 = vsyncadd %s1695, 0
          %s1704 = smul.addr %s34, 8
          %s1705 = scalar_lea.hbm %s20, %s1704
          %s1707 = sshll.u32 %s1698, 4
          %s1708 = int_to_ptr.vmem [resolvable:$true] %s1707
          %s1709 = sshll.u32 %s1705, 4
          %s1710 = int_to_ptr.hbm [resolvable:$true] %s1709
          %1712 = dma.vmem_to_hbm [thread:$0]  %s1708, 128, %s1710, %s1695
        $region104: #{tpu_custom_call.1} parent=99 // pred_fallthru
          _
      $region100: #{tpu_custom_call.1} parent=5 // pred_fallthru
        _
      %p1713 = scmp.le.s32.totalorder 2, %s29
      // Predicated region
      $region105: #{tpu_custom_call.1} parent=5 // pred_check
        %p1714 = pneg %p1713
      $region106: #{tpu_custom_call.1} parent=5 // pred_check_branch
        %1716 = sbr.rel (%p1714) target = $region108
      $region107: #{tpu_custom_call.1} parent=5 // pred_region
        %s1717 = ssub.s32 %s29, 2
        // Predicated region
        $region109: #{tpu_custom_call.1} parent=107 // pred_check
          %p1718 = pneg %p483
        $region110: #{tpu_custom_call.1} parent=107 // pred_check_branch
          %1720 = sbr.rel (%p1718) target = $region112
        $region111: #{tpu_custom_call.1} parent=107 // pred_region
          %s1721 = sand.u32 %s468, 1
          %s1722 = scalar_lea.sflag [#allocation9], %s1721
          %s1723 = sand.u32 %s468, 1
          %s1724 = smul.addr %s1723, 8
          %s1725 = scalar_lea.vmem [#allocation8], %s1724
          %1727 = dma.done %s1722, 128
        $region112: #{tpu_custom_call.1} parent=107 // pred_fallthru
          _
      $region108: #{tpu_custom_call.1} parent=5 // pred_fallthru
        _
    $region6: #{tpu_custom_call.1} parent=1 // loop_footer
      %s33 = sadd.s32 1, %s29
    $region7: #{tpu_custom_call.1} parent=1 // loop_footer_branch
      %28 = sbr.rel target = $region3
    $region8: #{tpu_custom_call.1} parent=1 // loop_exit
      _
    %1728 = vsyncpa [#allocation9], 1
    %s1729 = scalar_lea.sflag [#allocation9], 1
    %1730 = vsyncpa %s1729, 1

</llo_original>
